<compile_context>
chip_gen: v7x
topology: tpu7x:2x2x1
jax: 0.10.0
libtpu: 0.0.40
codegen_flags: <defaults>
</compile_context>

<pallas_src>
import jax
import jax.numpy as jnp
from jax.experimental import pallas as pl
from jax.experimental.pallas import tpu as pltpu


def _round_up(n, m):
    return ((n + m - 1) // m) * m


def _vmem_budget_bytes():
    """Generation-aware VMEM budget for sizing the time chunk."""
    try:
        kind = jax.devices()[0].device_kind.lower()
    except Exception:  # pragma: no cover
        kind = ""
    if "v7" in kind:
        return 40 << 20          # v7x: 64 MiB physical per TC, leave headroom
    return 96 << 20              # v5e / v6e: 128 MiB physical VMEM


def _layer_vmem_bytes(block_rows, dp, hp, bp):
    """Estimated VMEM footprint of one rnn_layer pallas_call."""
    x_blk = 2 * block_rows * dp * 2          # bf16 x, double-buffered
    out_blk = 2 * block_rows * hp * 2        # bf16 out, double-buffered
    weights = dp * hp * 2 + hp * hp * 2      # bf16, single-buffered (Buffered(1))
    bias = 8 * hp * 4                        # (1,Hp) f32, padded to 8 sublanes
    h0 = bp * hp * 4                         # f32, single-buffered
    scratch = bp * hp * 4 + block_rows * hp * 4  # h_carry + z_scratch (f32)
    return x_blk + out_blk + weights + bias + h0 + scratch


# ---------------------------------------------------------------------------
# Pallas kernel: one RNN layer, grid iterates over time chunks (sequential).
# ---------------------------------------------------------------------------
def _rnn_layer_kernel(x_ref, h0_ref, wih_ref, whh_ref, b_ref,
                      out_ref, h_carry, z_scratch):
    """One time-chunk of one RNN layer.

    x_ref    : (Tc*Bp, Dp) bf16  time-major rows (row = t*Bp + b) for this chunk
    h0_ref   : (Bp, Hp)    f32   initial hidden state
    wih_ref  : (Dp, Hp)    bf16  W_ih^T (zero-padded)
    whh_ref  : (Hp, Hp)    bf16  W_hh^T (zero-padded)
    b_ref    : (1, Hp)     f32   b_ih + b_hh (zero-padded lanes)
    out_ref  : (Tc*Bp, Hp) bf16  hidden states for this chunk
    h_carry  : (Bp, Hp)    f32   VMEM carry across grid steps
    z_scratch: (Tc*Bp, Hp) f32   VMEM buffer: hoisted projection, then h_t
    """
    chunk = pl.program_id(0)

    @pl.when(chunk == 0)
    def _():
        h_carry[...] = h0_ref[...]

    bp = h0_ref.shape[0]
    tc = x_ref.shape[0] // bp

    # Hoisted input projection: ONE bf16 MXU matmul for the whole chunk
    # (f32 accumulation) instead of one tiny matmul per timestep.
    # TODO(synk): software-pipeline this in 4-8 timestep sub-tiles against the
    # recurrence below to fill the MXU slack of the latency-bound serial loop.
    z_scratch[...] = (
        jnp.dot(x_ref[...], wih_ref[...], preferred_element_type=jnp.float32)
        + b_ref[...])

    # Serial recurrence: one (Bp,Hp)@(Hp,Hp) matmul + tanh per step. h carried
    # in f32; the per-step result is written back into z_scratch so the only
    # out_ref store is one bulk lane/sublane-dense bf16 store after the loop.
    # TODO(synk): hold W_hh^T in MXU weight staging across the chunk
    # (pltpu.matmul_push_rhs / matmul_acc_lhs / matmul_pop; MRB accumulate on
    # v7x) if the bundle dump shows Mosaic re-pushing Hp weight rows per step.
    def step(t, h):
        r = pl.multiple_of(t * bp, bp)                # sublane-aligned offset
        h_new = jnp.tanh(
            z_scratch[pl.ds(r, bp), :]
            + jnp.dot(h.astype(whh_ref.dtype), whh_ref[...],
                      preferred_element_type=jnp.float32))
        z_scratch[pl.ds(r, bp), :] = h_new
        return h_new

    h_last = jax.lax.fori_loop(0, tc, step, h_carry[...], unroll=min(8, tc))
    h_carry[...] = h_last

    # Single bulk cast-and-store of the whole chunk (unmasked bf16 tiles since
    # Tc*Bp is kept a multiple of 16 by the wrapper).
    out_ref[...] = z_scratch[...].astype(out_ref.dtype)


def rnn_layer(x_flat, h0_p, w_ih_t, w_hh_t, bias, *, n_time_chunks):
    """x_flat: (Tp*Bp, Dp) bf16 time-major flat slab. Returns (Tp*Bp, Hp) bf16."""
    rows, Dp = x_flat.shape
    Bp, Hp = h0_p.shape
    block_rows = rows // n_time_chunks

    vmem_est = _layer_vmem_bytes(block_rows, Dp, Hp, Bp)
    vmem_limit = int(min(int(1.25 * vmem_est) + (2 << 20), 100 << 20))

    flops = 2 * rows * Dp * Hp + 2 * rows * Hp * Hp
    bytes_accessed = (rows * Dp * 2 + rows * Hp * 2            # x in, out
                      + Dp * Hp * 2 + Hp * Hp * 2              # weights
                      + Hp * 4 + Bp * Hp * 4)                  # bias, h0
    cost = pl.CostEstimate(flops=flops, transcendentals=rows * Hp,
                           bytes_accessed=bytes_accessed)

    grid_spec = pltpu.PrefetchScalarGridSpec(
        num_scalar_prefetch=0,
        grid=(n_time_chunks,),
        in_specs=[
            # x chunk: streamed, double-buffered (default).
            pl.BlockSpec((block_rows, Dp), lambda t: (t, 0)),
            # Constant-index operands: single-buffered (no 2x VMEM for weights).
            pl.BlockSpec((Bp, Hp), lambda t: (0, 0),
                         pipeline_mode=pl.Buffered(1)),          # h0
            pl.BlockSpec((Dp, Hp), lambda t: (0, 0),
                         pipeline_mode=pl.Buffered(1)),          # W_ih^T
            pl.BlockSpec((Hp, Hp), lambda t: (0, 0),
                         pipeline_mode=pl.Buffered(1)),          # W_hh^T
            pl.BlockSpec((1, Hp), lambda t: (0, 0),
                         pipeline_mode=pl.Buffered(1)),          # bias
        ],
        out_specs=pl.BlockSpec((block_rows, Hp), lambda t: (t, 0)),
        scratch_shapes=[
            pltpu.VMEM((Bp, Hp), jnp.float32),          # h carry
            pltpu.VMEM((block_rows, Hp), jnp.float32),  # projection / h_t buffer
        ],
    )
    return pl.pallas_call(
        _rnn_layer_kernel,
        grid_spec=grid_spec,
        out_shape=jax.ShapeDtypeStruct((rows, Hp), jnp.bfloat16),
        cost_estimate=cost,
        compiler_params=pltpu.CompilerParams(
            dimension_semantics=("arbitrary",),        # recurrence -> sequential
            vmem_limit_bytes=vmem_limit),
    )(x_flat, h0_p, w_ih_t, w_hh_t, bias)


# ---------------------------------------------------------------------------
# Parameters (PyTorch-style init, packed/padded for the TPU kernel)
# ---------------------------------------------------------------------------
def init_params(key, input_dim, hidden_dim, layer_dim, output_dim):
    """U(-1/sqrt(H), 1/sqrt(H)) init like nn.RNN / nn.Linear.

    RNN weights are transposed, zero-padded to lane-dense shapes (multiples of
    128) and cast to bfloat16; the fused bias (b_ih + b_hh) stays f32. The FC
    head stays unpadded f32 (computed in plain XLA)."""
    Dp = _round_up(input_dim, 128)
    Hp = _round_up(hidden_dim, 128)
    k = 1.0 / jnp.sqrt(jnp.float32(hidden_dim))

    params = {"rnn": [], "fc": {}}
    for l in range(layer_dim):
        d_in = input_dim if l == 0 else hidden_dim
        d_in_p = Dp if l == 0 else Hp
        key, k1, k2, k3, k4 = jax.random.split(key, 5)
        w_ih = jax.random.uniform(k1, (hidden_dim, d_in), jnp.float32, -k, k)
        w_hh = jax.random.uniform(k2, (hidden_dim, hidden_dim), jnp.float32, -k, k)
        b_ih = jax.random.uniform(k3, (hidden_dim,), jnp.float32, -k, k)
        b_hh = jax.random.uniform(k4, (hidden_dim,), jnp.float32, -k, k)
        w_ih_t = jnp.zeros((d_in_p, Hp), jnp.float32).at[:d_in, :hidden_dim].set(w_ih.T)
        w_hh_t = jnp.zeros((Hp, Hp), jnp.float32).at[:hidden_dim, :hidden_dim].set(w_hh.T)
        bias = jnp.zeros((1, Hp), jnp.float32).at[0, :hidden_dim].set(b_ih + b_hh)
        params["rnn"].append({
            "w_ih_t": w_ih_t.astype(jnp.bfloat16),   # (d_in_p, Hp) bf16
            "w_hh_t": w_hh_t.astype(jnp.bfloat16),   # (Hp, Hp)     bf16
            "bias": bias,                            # (1, Hp)      f32
        })
    key, k1, k2 = jax.random.split(key, 3)
    w_fc = jax.random.uniform(k1, (output_dim, hidden_dim), jnp.float32, -k, k)
    b_fc = jax.random.uniform(k2, (output_dim,), jnp.float32, -k, k)
    params["fc"] = {"w_t": w_fc.T, "b": b_fc[None, :]}   # (H, O), (1, O) f32
    return params


# ---------------------------------------------------------------------------
# Forward pass
# ---------------------------------------------------------------------------
def _pick_time_chunk(T, Bp, Dp, Hp):
    """Largest time chunk whose VMEM footprint fits the generation budget."""
    t_align = 1 if Bp % 16 == 0 else 2    # keep Tc*Bp a multiple of 16 (bf16 tiles)
    budget = _vmem_budget_bytes()
    dmax = max(Dp, Hp)
    tc = t_align
    for cand in (128, 96, 64, 48, 32, 24, 16, 8, 4, 2):
        cand = _round_up(min(cand, _round_up(T, t_align)), t_align)
        if _layer_vmem_bytes(cand * Bp, dmax, Hp, Bp) <= budget:
            tc = cand
            break
    return tc


@jax.jit
def rnn_model_forward(params, x, h0=None):
    """x: (B, T, input_dim) batch-first; h0: (layer_dim, B, H) or None.
    Returns (out (B, output_dim), hn (layer_dim, B, H))."""
    B, T, D = x.shape
    L = len(params["rnn"])
    Dp, Hp = params["rnn"][0]["w_ih_t"].shape
    H, O = params["fc"]["w_t"].shape
    if h0 is None:
        h0 = jnp.zeros((L, B, H), jnp.float32)

    Bp = _round_up(max(B, 8), 8)                      # sublane-full batch
    Tc = _pick_time_chunk(T, Bp, Dp, Hp)              # generation-aware chunk
    Tp = _round_up(T, Tc)

    # Time-major, zero-padded, flattened to a lane/sublane-dense bf16 2-D slab
    # (row = t*Bp + b). Padded time steps come after T-1 so they never affect
    # the outputs we read (recurrence is causal); padded hidden lanes stay 0
    # because padded weight rows/cols and bias lanes are 0.
    # TODO(synk): on v7x (2 TensorCores/chip), add a leading "parallel" batch
    # grid axis splitting Bp in half when B >= 16.
    x_tm = jnp.transpose(x, (1, 0, 2)).astype(jnp.bfloat16)
    x_tm = jnp.pad(x_tm, ((0, Tp - T), (0, Bp - B), (0, Dp - D)))
    cur = x_tm.reshape(Tp * Bp, Dp)
    h0_p = jnp.pad(h0.astype(jnp.float32), ((0, 0), (0, Bp - B), (0, Hp - H)))

    hns = []
    for l, p in enumerate(params["rnn"]):
        # TODO(synk): wavefront-fuse all L layers into one pallas_call keeping
        # inter-layer activations resident in VMEM (removes the per-layer HBM
        # round trip and puts L independent matmuls in flight per serial step).
        cur = rnn_layer(cur, h0_p[l], p["w_ih_t"], p["w_hh_t"], p["bias"],
                        n_time_chunks=Tp // Tc)
        # hn = hidden state after the true last timestep (row block T-1)
        hns.append(cur[(T - 1) * Bp:(T - 1) * Bp + B, :H].astype(jnp.float32))
        # nn.RNN inter-layer dropout is identity at inference time.
    hn = jnp.stack(hns, axis=0)                               # (L, B, H)

    # Final FC head in plain XLA: a standalone pallas_call for a (B,H)@(H,O)
    # matmul would be pure launch/DMA overhead.
    last = hns[-1]                                            # (B, H) f32
    out = jnp.dot(last, params["fc"]["w_t"],
                  preferred_element_type=jnp.float32) + params["fc"]["b"]
    return out, hn


# ---------------------------------------------------------------------------
# Pure-jnp reference (same bf16 arithmetic) for the self-check
# ---------------------------------------------------------------------------
def _reference_forward(params, x, h0):
    B, T, D = x.shape
    H, O = params["fc"]["w_t"].shape
    cur = jnp.transpose(x, (1, 0, 2)).astype(jnp.bfloat16)    # (T, B, d)
    hns = []
    for li, p in enumerate(params["rnn"]):
        wih, whh, bias = p["w_ih_t"], p["w_hh_t"], p["bias"]
        d_in_p, Hp = wih.shape
        xp = jnp.pad(cur, ((0, 0), (0, 0), (0, d_in_p - cur.shape[-1])))
        xp = xp.astype(jnp.bfloat16)
        h = jnp.pad(h0[li].astype(jnp.float32), ((0, 0), (0, Hp - H)))
        outs = []
        for t in range(T):
            z = (jnp.dot(xp[t], wih, preferred_element_type=jnp.float32) + bias
                 + jnp.dot(h.astype(jnp.bfloat16), whh,
                           preferred_element_type=jnp.float32))
            h = jnp.tanh(z)
            outs.append(h.astype(jnp.bfloat16))                # bf16 layer output
        cur = jnp.stack(outs, axis=0)                          # (T, B, Hp) bf16
        hns.append(cur[T - 1][:, :H].astype(jnp.float32))
    hn = jnp.stack(hns, axis=0)
    out = jnp.dot(hns[-1], params["fc"]["w_t"],
                  preferred_element_type=jnp.float32) + params["fc"]["b"]
    return out, hn


# ---------------------------------------------------------------------------
if __name__ == "__main__":
    B, T = 2, 8
    input_dim, hidden_dim, layer_dim, output_dim = 16, 32, 2, 8

    key = jax.random.PRNGKey(0)
    key, xkey, pkey = jax.random.split(key, 3)
    x = jax.random.normal(xkey, (B, T, input_dim), jnp.float32)
    h0 = jnp.zeros((layer_dim, B, hidden_dim), jnp.float32)   # default h0 path

    params = init_params(pkey, input_dim, hidden_dim, layer_dim, output_dim)

    out, hn = rnn_model_forward(params, x, h0)
    jax.block_until_ready((out, hn))

    assert out.shape == (B, output_dim)
    assert hn.shape == (layer_dim, B, hidden_dim)

    # Correctness self-check against a pure-jnp reference with identical
    # arithmetic (bf16 operands, f32 accumulation, bf16 inter-layer slab).
    out_ref, hn_ref = _reference_forward(params, x, h0)
    assert jnp.allclose(out, out_ref, atol=2e-2, rtol=2e-2), "out mismatch"
    assert jnp.allclose(hn, hn_ref, atol=2e-2, rtol=2e-2), "hn mismatch"

    print("KERNEL_OK")
</pallas_src>

<mosaic_0001>
module attributes {stable_mosaic.version = 11 : i64} {
  func.func @_rnn_layer_kernel(%arg0: i32, %arg1: memref<64x128xbf16, #tpu.memory_space<vmem>>, %arg2: memref<8x128xf32, #tpu.memory_space<vmem>>, %arg3: memref<128x128xbf16, #tpu.memory_space<vmem>>, %arg4: memref<128x128xbf16, #tpu.memory_space<vmem>>, %arg5: memref<1x128xf32, #tpu.memory_space<vmem>>, %arg6: memref<64x128xbf16, #tpu.memory_space<vmem>>, %arg7: memref<8x128xf32, #tpu.memory_space<vmem>>, %arg8: memref<64x128xf32, #tpu.memory_space<vmem>>) attributes {dimension_semantics = [#tpu.dimension_semantics<arbitrary>], iteration_bounds = array<i64: 1>, scalar_prefetch = 0 : i64, scratch_operands = 2 : i64, tpu.core_type = #tpu.core_type<tc>, window_params = [{transform_indices = @transform_0, window_bounds = array<i64: 64, 128>}, {pipeline_mode = #tpu.pipeline_mode<synchronous>, transform_indices = @transform_1, window_bounds = array<i64: 8, 128>}, {pipeline_mode = #tpu.pipeline_mode<synchronous>, transform_indices = @transform_2, window_bounds = array<i64: 128, 128>}, {pipeline_mode = #tpu.pipeline_mode<synchronous>, transform_indices = @transform_3, window_bounds = array<i64: 128, 128>}, {pipeline_mode = #tpu.pipeline_mode<synchronous>, transform_indices = @transform_4, window_bounds = array<i64: 1, 128>}, {transform_indices = @transform_5, window_bounds = array<i64: 64, 128>}]} {
    %c0_i32 = arith.constant 0 : i32
    %0 = arith.cmpi eq, %arg0, %c0_i32 : i32
    %1 = arith.extui %0 : i1 to i32
    %c0_i32_0 = arith.constant 0 : i32
    %2 = arith.cmpi ne, %1, %c0_i32_0 : i32
    scf.if %2 {
      %c0_65 = arith.constant 0 : index
      %c0_66 = arith.constant 0 : index
      %103 = vector.load %arg2[%c0_65, %c0_66] : memref<8x128xf32, #tpu.memory_space<vmem>>, vector<8x128xf32>
      %c0_67 = arith.constant 0 : index
      %c0_68 = arith.constant 0 : index
      %104 = vector.load %arg7[%c0_67, %c0_68] : memref<8x128xf32, #tpu.memory_space<vmem>>, vector<8x128xf32>
      tpu.vector_store %arg7[%c0_67, %c0_68], %103 {strides = array<i32>} : memref<8x128xf32, #tpu.memory_space<vmem>>, vector<8x128xf32>,
    } else {
    }
    %c0 = arith.constant 0 : index
    %c0_1 = arith.constant 0 : index
    %3 = vector.load %arg1[%c0, %c0_1] : memref<64x128xbf16, #tpu.memory_space<vmem>>, vector<64x128xbf16>
    %c0_2 = arith.constant 0 : index
    %c0_3 = arith.constant 0 : index
    %4 = vector.load %arg3[%c0_2, %c0_3] : memref<128x128xbf16, #tpu.memory_space<vmem>>, vector<128x128xbf16>
    %cst = arith.constant dense<0.000000e+00> : vector<64x128xf32>
    %5 = tpu.matmul %3, %4, %cst {dimension_numbers = #tpu.dot_dimension_numbers<[1], [0], [0], [1], [0, 0, 1, 1], [], []>} : vector<64x128xbf16>, vector<128x128xbf16>, vector<64x128xf32> -> vector<64x128xf32>
    %c0_4 = arith.constant 0 : index
    %c0_5 = arith.constant 0 : index
    %6 = vector.load %arg5[%c0_4, %c0_5] : memref<1x128xf32, #tpu.memory_space<vmem>>, vector<1x128xf32>
    %7 = vector.broadcast %6 : vector<1x128xf32> to vector<64x128xf32>
    %8 = arith.addf %5, %7 : vector<64x128xf32>
    %c0_6 = arith.constant 0 : index
    %c0_7 = arith.constant 0 : index
    %9 = vector.load %arg8[%c0_6, %c0_7] : memref<64x128xf32, #tpu.memory_space<vmem>>, vector<64x128xf32>
    tpu.vector_store %arg8[%c0_6, %c0_7], %8 {strides = array<i32>} : memref<64x128xf32, #tpu.memory_space<vmem>>, vector<64x128xf32>,
    %c0_8 = arith.constant 0 : index
    %c0_9 = arith.constant 0 : index
    %10 = vector.load %arg7[%c0_8, %c0_9] : memref<8x128xf32, #tpu.memory_space<vmem>>, vector<8x128xf32>
    %c0_i32_10 = arith.constant 0 : i32
    %c8_i32 = arith.constant 8 : i32
    %11 = arith.muli %c0_i32_10, %c8_i32 : i32
    %12 = tpu.assume_multiple %11, 8 : i32
    %13 = arith.index_cast %12 : i32 to index
    %c0_11 = arith.constant 0 : index
    %14 = vector.load %arg8[%13, %c0_11] : memref<64x128xf32, #tpu.memory_space<vmem>>, vector<8x128xf32>
    %15 = arith.truncf %10 : vector<8x128xf32> to vector<8x128xbf16>
    %c0_12 = arith.constant 0 : index
    %c0_13 = arith.constant 0 : index
    %16 = vector.load %arg4[%c0_12, %c0_13] : memref<128x128xbf16, #tpu.memory_space<vmem>>, vector<128x128xbf16>
    %cst_14 = arith.constant dense<0.000000e+00> : vector<8x128xf32>
    %17 = tpu.matmul %15, %16, %cst_14 {dimension_numbers = #tpu.dot_dimension_numbers<[1], [0], [0], [1], [0, 0, 1, 1], [], []>} : vector<8x128xbf16>, vector<128x128xbf16>, vector<8x128xf32> -> vector<8x128xf32>
    %18 = arith.addf %14, %17 : vector<8x128xf32>
    %19 = math.tanh %18 : vector<8x128xf32>
    %20 = arith.index_cast %12 : i32 to index
    %c0_15 = arith.constant 0 : index
    %21 = vector.load %arg8[%20, %c0_15] : memref<64x128xf32, #tpu.memory_space<vmem>>, vector<8x128xf32>
    tpu.vector_store %arg8[%20, %c0_15], %19 {strides = array<i32>} : memref<64x128xf32, #tpu.memory_space<vmem>>, vector<8x128xf32>,
    %c1_i32 = arith.constant 1 : i32
    %c8_i32_16 = arith.constant 8 : i32
    %22 = arith.muli %c1_i32, %c8_i32_16 : i32
    %23 = tpu.assume_multiple %22, 8 : i32
    %24 = arith.index_cast %23 : i32 to index
    %c0_17 = arith.constant 0 : index
    %25 = vector.load %arg8[%24, %c0_17] : memref<64x128xf32, #tpu.memory_space<vmem>>, vector<8x128xf32>
    %26 = arith.truncf %19 : vector<8x128xf32> to vector<8x128xbf16>
    %c0_18 = arith.constant 0 : index
    %c0_19 = arith.constant 0 : index
    %27 = vector.load %arg4[%c0_18, %c0_19] : memref<128x128xbf16, #tpu.memory_space<vmem>>, vector<128x128xbf16>
    %cst_20 = arith.constant dense<0.000000e+00> : vector<8x128xf32>
    %28 = tpu.matmul %26, %27, %cst_20 {dimension_numbers = #tpu.dot_dimension_numbers<[1], [0], [0], [1], [0, 0, 1, 1], [], []>} : vector<8x128xbf16>, vector<128x128xbf16>, vector<8x128xf32> -> vector<8x128xf32>
    %29 = arith.addf %25, %28 : vector<8x128xf32>
    %30 = math.tanh %29 : vector<8x128xf32>
    %31 = arith.index_cast %23 : i32 to index
    %c0_21 = arith.constant 0 : index
    %32 = vector.load %arg8[%31, %c0_21] : memref<64x128xf32, #tpu.memory_space<vmem>>, vector<8x128xf32>
    tpu.vector_store %arg8[%31, %c0_21], %30 {strides = array<i32>} : memref<64x128xf32, #tpu.memory_space<vmem>>, vector<8x128xf32>,
    %c2_i32 = arith.constant 2 : i32
    %c8_i32_22 = arith.constant 8 : i32
    %33 = arith.muli %c2_i32, %c8_i32_22 : i32
    %34 = tpu.assume_multiple %33, 8 : i32
    %35 = arith.index_cast %34 : i32 to index
    %c0_23 = arith.constant 0 : index
    %36 = vector.load %arg8[%35, %c0_23] : memref<64x128xf32, #tpu.memory_space<vmem>>, vector<8x128xf32>
    %37 = arith.truncf %30 : vector<8x128xf32> to vector<8x128xbf16>
    %c0_24 = arith.constant 0 : index
    %c0_25 = arith.constant 0 : index
    %38 = vector.load %arg4[%c0_24, %c0_25] : memref<128x128xbf16, #tpu.memory_space<vmem>>, vector<128x128xbf16>
    %cst_26 = arith.constant dense<0.000000e+00> : vector<8x128xf32>
    %39 = tpu.matmul %37, %38, %cst_26 {dimension_numbers = #tpu.dot_dimension_numbers<[1], [0], [0], [1], [0, 0, 1, 1], [], []>} : vector<8x128xbf16>, vector<128x128xbf16>, vector<8x128xf32> -> vector<8x128xf32>
    %40 = arith.addf %36, %39 : vector<8x128xf32>
    %41 = math.tanh %40 : vector<8x128xf32>
    %42 = arith.index_cast %34 : i32 to index
    %c0_27 = arith.constant 0 : index
    %43 = vector.load %arg8[%42, %c0_27] : memref<64x128xf32, #tpu.memory_space<vmem>>, vector<8x128xf32>
    tpu.vector_store %arg8[%42, %c0_27], %41 {strides = array<i32>} : memref<64x128xf32, #tpu.memory_space<vmem>>, vector<8x128xf32>,
    %c3_i32 = arith.constant 3 : i32
    %c8_i32_28 = arith.constant 8 : i32
    %44 = arith.muli %c3_i32, %c8_i32_28 : i32
    %45 = tpu.assume_multiple %44, 8 : i32
    %46 = arith.index_cast %45 : i32 to index
    %c0_29 = arith.constant 0 : index
    %47 = vector.load %arg8[%46, %c0_29] : memref<64x128xf32, #tpu.memory_space<vmem>>, vector<8x128xf32>
    %48 = arith.truncf %41 : vector<8x128xf32> to vector<8x128xbf16>
    %c0_30 = arith.constant 0 : index
    %c0_31 = arith.constant 0 : index
    %49 = vector.load %arg4[%c0_30, %c0_31] : memref<128x128xbf16, #tpu.memory_space<vmem>>, vector<128x128xbf16>
    %cst_32 = arith.constant dense<0.000000e+00> : vector<8x128xf32>
    %50 = tpu.matmul %48, %49, %cst_32 {dimension_numbers = #tpu.dot_dimension_numbers<[1], [0], [0], [1], [0, 0, 1, 1], [], []>} : vector<8x128xbf16>, vector<128x128xbf16>, vector<8x128xf32> -> vector<8x128xf32>
    %51 = arith.addf %47, %50 : vector<8x128xf32>
    %52 = math.tanh %51 : vector<8x128xf32>
    %53 = arith.index_cast %45 : i32 to index
    %c0_33 = arith.constant 0 : index
    %54 = vector.load %arg8[%53, %c0_33] : memref<64x128xf32, #tpu.memory_space<vmem>>, vector<8x128xf32>
    tpu.vector_store %arg8[%53, %c0_33], %52 {strides = array<i32>} : memref<64x128xf32, #tpu.memory_space<vmem>>, vector<8x128xf32>,
    %c4_i32 = arith.constant 4 : i32
    %c8_i32_34 = arith.constant 8 : i32
    %55 = arith.muli %c4_i32, %c8_i32_34 : i32
    %56 = tpu.assume_multiple %55, 8 : i32
    %57 = arith.index_cast %56 : i32 to index
    %c0_35 = arith.constant 0 : index
    %58 = vector.load %arg8[%57, %c0_35] : memref<64x128xf32, #tpu.memory_space<vmem>>, vector<8x128xf32>
    %59 = arith.truncf %52 : vector<8x128xf32> to vector<8x128xbf16>
    %c0_36 = arith.constant 0 : index
    %c0_37 = arith.constant 0 : index
    %60 = vector.load %arg4[%c0_36, %c0_37] : memref<128x128xbf16, #tpu.memory_space<vmem>>, vector<128x128xbf16>
    %cst_38 = arith.constant dense<0.000000e+00> : vector<8x128xf32>
    %61 = tpu.matmul %59, %60, %cst_38 {dimension_numbers = #tpu.dot_dimension_numbers<[1], [0], [0], [1], [0, 0, 1, 1], [], []>} : vector<8x128xbf16>, vector<128x128xbf16>, vector<8x128xf32> -> vector<8x128xf32>
    %62 = arith.addf %58, %61 : vector<8x128xf32>
    %63 = math.tanh %62 : vector<8x128xf32>
    %64 = arith.index_cast %56 : i32 to index
    %c0_39 = arith.constant 0 : index
    %65 = vector.load %arg8[%64, %c0_39] : memref<64x128xf32, #tpu.memory_space<vmem>>, vector<8x128xf32>
    tpu.vector_store %arg8[%64, %c0_39], %63 {strides = array<i32>} : memref<64x128xf32, #tpu.memory_space<vmem>>, vector<8x128xf32>,
    %c5_i32 = arith.constant 5 : i32
    %c8_i32_40 = arith.constant 8 : i32
    %66 = arith.muli %c5_i32, %c8_i32_40 : i32
    %67 = tpu.assume_multiple %66, 8 : i32
    %68 = arith.index_cast %67 : i32 to index
    %c0_41 = arith.constant 0 : index
    %69 = vector.load %arg8[%68, %c0_41] : memref<64x128xf32, #tpu.memory_space<vmem>>, vector<8x128xf32>
    %70 = arith.truncf %63 : vector<8x128xf32> to vector<8x128xbf16>
    %c0_42 = arith.constant 0 : index
    %c0_43 = arith.constant 0 : index
    %71 = vector.load %arg4[%c0_42, %c0_43] : memref<128x128xbf16, #tpu.memory_space<vmem>>, vector<128x128xbf16>
    %cst_44 = arith.constant dense<0.000000e+00> : vector<8x128xf32>
    %72 = tpu.matmul %70, %71, %cst_44 {dimension_numbers = #tpu.dot_dimension_numbers<[1], [0], [0], [1], [0, 0, 1, 1], [], []>} : vector<8x128xbf16>, vector<128x128xbf16>, vector<8x128xf32> -> vector<8x128xf32>
    %73 = arith.addf %69, %72 : vector<8x128xf32>
    %74 = math.tanh %73 : vector<8x128xf32>
    %75 = arith.index_cast %67 : i32 to index
    %c0_45 = arith.constant 0 : index
    %76 = vector.load %arg8[%75, %c0_45] : memref<64x128xf32, #tpu.memory_space<vmem>>, vector<8x128xf32>
    tpu.vector_store %arg8[%75, %c0_45], %74 {strides = array<i32>} : memref<64x128xf32, #tpu.memory_space<vmem>>, vector<8x128xf32>,
    %c6_i32 = arith.constant 6 : i32
    %c8_i32_46 = arith.constant 8 : i32
    %77 = arith.muli %c6_i32, %c8_i32_46 : i32
    %78 = tpu.assume_multiple %77, 8 : i32
    %79 = arith.index_cast %78 : i32 to index
    %c0_47 = arith.constant 0 : index
    %80 = vector.load %arg8[%79, %c0_47] : memref<64x128xf32, #tpu.memory_space<vmem>>, vector<8x128xf32>
    %81 = arith.truncf %74 : vector<8x128xf32> to vector<8x128xbf16>
    %c0_48 = arith.constant 0 : index
    %c0_49 = arith.constant 0 : index
    %82 = vector.load %arg4[%c0_48, %c0_49] : memref<128x128xbf16, #tpu.memory_space<vmem>>, vector<128x128xbf16>
    %cst_50 = arith.constant dense<0.000000e+00> : vector<8x128xf32>
    %83 = tpu.matmul %81, %82, %cst_50 {dimension_numbers = #tpu.dot_dimension_numbers<[1], [0], [0], [1], [0, 0, 1, 1], [], []>} : vector<8x128xbf16>, vector<128x128xbf16>, vector<8x128xf32> -> vector<8x128xf32>
    %84 = arith.addf %80, %83 : vector<8x128xf32>
    %85 = math.tanh %84 : vector<8x128xf32>
    %86 = arith.index_cast %78 : i32 to index
    %c0_51 = arith.constant 0 : index
    %87 = vector.load %arg8[%86, %c0_51] : memref<64x128xf32, #tpu.memory_space<vmem>>, vector<8x128xf32>
    tpu.vector_store %arg8[%86, %c0_51], %85 {strides = array<i32>} : memref<64x128xf32, #tpu.memory_space<vmem>>, vector<8x128xf32>,
    %c7_i32 = arith.constant 7 : i32
    %c8_i32_52 = arith.constant 8 : i32
    %88 = arith.muli %c7_i32, %c8_i32_52 : i32
    %89 = tpu.assume_multiple %88, 8 : i32
    %90 = arith.index_cast %89 : i32 to index
    %c0_53 = arith.constant 0 : index
    %91 = vector.load %arg8[%90, %c0_53] : memref<64x128xf32, #tpu.memory_space<vmem>>, vector<8x128xf32>
    %92 = arith.truncf %85 : vector<8x128xf32> to vector<8x128xbf16>
    %c0_54 = arith.constant 0 : index
    %c0_55 = arith.constant 0 : index
    %93 = vector.load %arg4[%c0_54, %c0_55] : memref<128x128xbf16, #tpu.memory_space<vmem>>, vector<128x128xbf16>
    %cst_56 = arith.constant dense<0.000000e+00> : vector<8x128xf32>
    %94 = tpu.matmul %92, %93, %cst_56 {dimension_numbers = #tpu.dot_dimension_numbers<[1], [0], [0], [1], [0, 0, 1, 1], [], []>} : vector<8x128xbf16>, vector<128x128xbf16>, vector<8x128xf32> -> vector<8x128xf32>
    %95 = arith.addf %91, %94 : vector<8x128xf32>
    %96 = math.tanh %95 : vector<8x128xf32>
    %97 = arith.index_cast %89 : i32 to index
    %c0_57 = arith.constant 0 : index
    %98 = vector.load %arg8[%97, %c0_57] : memref<64x128xf32, #tpu.memory_space<vmem>>, vector<8x128xf32>
    tpu.vector_store %arg8[%97, %c0_57], %96 {strides = array<i32>} : memref<64x128xf32, #tpu.memory_space<vmem>>, vector<8x128xf32>,
    %c8_i32_58 = arith.constant 8 : i32
    %c0_59 = arith.constant 0 : index
    %c0_60 = arith.constant 0 : index
    %99 = vector.load %arg7[%c0_59, %c0_60] : memref<8x128xf32, #tpu.memory_space<vmem>>, vector<8x128xf32>
    tpu.vector_store %arg7[%c0_59, %c0_60], %96 {strides = array<i32>} : memref<8x128xf32, #tpu.memory_space<vmem>>, vector<8x128xf32>,
    %c0_61 = arith.constant 0 : index
    %c0_62 = arith.constant 0 : index
    %100 = vector.load %arg8[%c0_61, %c0_62] : memref<64x128xf32, #tpu.memory_space<vmem>>, vector<64x128xf32>
    %101 = arith.truncf %100 : vector<64x128xf32> to vector<64x128xbf16>
    %c0_63 = arith.constant 0 : index
    %c0_64 = arith.constant 0 : index
    %102 = vector.load %arg6[%c0_63, %c0_64] : memref<64x128xbf16, #tpu.memory_space<vmem>>, vector<64x128xbf16>
    tpu.vector_store %arg6[%c0_63, %c0_64], %101 {strides = array<i32>} : memref<64x128xbf16, #tpu.memory_space<vmem>>, vector<64x128xbf16>,
    return
  }
  func.func @transform_0(%arg0: i32) -> (i32, i32) {
    %c0_i32 = arith.constant 0 : i32
    %c0_i32_0 = arith.constant 0 : i32
    return %arg0, %c0_i32 : i32, i32
  }
  func.func @transform_1(%arg0: i32) -> (i32, i32) {
    %c0_i32 = arith.constant 0 : i32
    %c0_i32_0 = arith.constant 0 : i32
    %c0_i32_1 = arith.constant 0 : i32
    return %c0_i32, %c0_i32_0 : i32, i32
  }
  func.func @transform_2(%arg0: i32) -> (i32, i32) {
    %c0_i32 = arith.constant 0 : i32
    %c0_i32_0 = arith.constant 0 : i32
    %c0_i32_1 = arith.constant 0 : i32
    return %c0_i32, %c0_i32_0 : i32, i32
  }
  func.func @transform_3(%arg0: i32) -> (i32, i32) {
    %c0_i32 = arith.constant 0 : i32
    %c0_i32_0 = arith.constant 0 : i32
    %c0_i32_1 = arith.constant 0 : i32
    return %c0_i32, %c0_i32_0 : i32, i32
  }
  func.func @transform_4(%arg0: i32) -> (i32, i32) {
    %c0_i32 = arith.constant 0 : i32
    %c0_i32_0 = arith.constant 0 : i32
    %c0_i32_1 = arith.constant 0 : i32
    return %c0_i32, %c0_i32_0 : i32, i32
  }
  func.func @transform_5(%arg0: i32) -> (i32, i32) {
    %c0_i32 = arith.constant 0 : i32
    %c0_i32_0 = arith.constant 0 : i32
    return %arg0, %c0_i32 : i32, i32
  }
}

module attributes {stable_mosaic.version = 11 : i64} {
  func.func @_rnn_layer_kernel(%arg0: i32, %arg1: memref<64x128xbf16, #tpu.memory_space<vmem>>, %arg2: memref<8x128xf32, #tpu.memory_space<vmem>>, %arg3: memref<128x128xbf16, #tpu.memory_space<vmem>>, %arg4: memref<128x128xbf16, #tpu.memory_space<vmem>>, %arg5: memref<1x128xf32, #tpu.memory_space<vmem>>, %arg6: memref<64x128xbf16, #tpu.memory_space<vmem>>, %arg7: memref<8x128xf32, #tpu.memory_space<vmem>>, %arg8: memref<64x128xf32, #tpu.memory_space<vmem>>) attributes {dimension_semantics = [#tpu.dimension_semantics<arbitrary>], iteration_bounds = array<i64: 1>, scalar_prefetch = 0 : i64, scratch_operands = 2 : i64, tpu.core_type = #tpu.core_type<tc>, window_params = [{transform_indices = @transform_0, window_bounds = array<i64: 64, 128>}, {pipeline_mode = #tpu.pipeline_mode<synchronous>, transform_indices = @transform_1, window_bounds = array<i64: 8, 128>}, {pipeline_mode = #tpu.pipeline_mode<synchronous>, transform_indices = @transform_2, window_bounds = array<i64: 128, 128>}, {pipeline_mode = #tpu.pipeline_mode<synchronous>, transform_indices = @transform_3, window_bounds = array<i64: 128, 128>}, {pipeline_mode = #tpu.pipeline_mode<synchronous>, transform_indices = @transform_4, window_bounds = array<i64: 1, 128>}, {transform_indices = @transform_5, window_bounds = array<i64: 64, 128>}]} {
    %c0_i32 = arith.constant 0 : i32
    %0 = arith.cmpi eq, %arg0, %c0_i32 : i32
    %1 = arith.extui %0 : i1 to i32
    %c0_i32_0 = arith.constant 0 : i32
    %2 = arith.cmpi ne, %1, %c0_i32_0 : i32
    scf.if %2 {
      %c0_65 = arith.constant 0 : index
      %c0_66 = arith.constant 0 : index
      %103 = vector.load %arg2[%c0_65, %c0_66] : memref<8x128xf32, #tpu.memory_space<vmem>>, vector<8x128xf32>
      %c0_67 = arith.constant 0 : index
      %c0_68 = arith.constant 0 : index
      %104 = vector.load %arg7[%c0_67, %c0_68] : memref<8x128xf32, #tpu.memory_space<vmem>>, vector<8x128xf32>
      tpu.vector_store %arg7[%c0_67, %c0_68], %103 {strides = array<i32>} : memref<8x128xf32, #tpu.memory_space<vmem>>, vector<8x128xf32>,
    } else {
    }
    %c0 = arith.constant 0 : index
    %c0_1 = arith.constant 0 : index
    %3 = vector.load %arg1[%c0, %c0_1] : memref<64x128xbf16, #tpu.memory_space<vmem>>, vector<64x128xbf16>
    %c0_2 = arith.constant 0 : index
    %c0_3 = arith.constant 0 : index
    %4 = vector.load %arg3[%c0_2, %c0_3] : memref<128x128xbf16, #tpu.memory_space<vmem>>, vector<128x128xbf16>
    %cst = arith.constant dense<0.000000e+00> : vector<64x128xf32>
    %5 = tpu.matmul %3, %4, %cst {dimension_numbers = #tpu.dot_dimension_numbers<[1], [0], [0], [1], [0, 0, 1, 1], [], []>} : vector<64x128xbf16>, vector<128x128xbf16>, vector<64x128xf32> -> vector<64x128xf32>
    %c0_4 = arith.constant 0 : index
    %c0_5 = arith.constant 0 : index
    %6 = vector.load %arg5[%c0_4, %c0_5] : memref<1x128xf32, #tpu.memory_space<vmem>>, vector<1x128xf32>
    %7 = vector.broadcast %6 : vector<1x128xf32> to vector<64x128xf32>
    %8 = arith.addf %5, %7 : vector<64x128xf32>
    %c0_6 = arith.constant 0 : index
    %c0_7 = arith.constant 0 : index
    %9 = vector.load %arg8[%c0_6, %c0_7] : memref<64x128xf32, #tpu.memory_space<vmem>>, vector<64x128xf32>
    tpu.vector_store %arg8[%c0_6, %c0_7], %8 {strides = array<i32>} : memref<64x128xf32, #tpu.memory_space<vmem>>, vector<64x128xf32>,
    %c0_8 = arith.constant 0 : index
    %c0_9 = arith.constant 0 : index
    %10 = vector.load %arg7[%c0_8, %c0_9] : memref<8x128xf32, #tpu.memory_space<vmem>>, vector<8x128xf32>
    %c0_i32_10 = arith.constant 0 : i32
    %c8_i32 = arith.constant 8 : i32
    %11 = arith.muli %c0_i32_10, %c8_i32 : i32
    %12 = tpu.assume_multiple %11, 8 : i32
    %13 = arith.index_cast %12 : i32 to index
    %c0_11 = arith.constant 0 : index
    %14 = vector.load %arg8[%13, %c0_11] : memref<64x128xf32, #tpu.memory_space<vmem>>, vector<8x128xf32>
    %15 = arith.truncf %10 : vector<8x128xf32> to vector<8x128xbf16>
    %c0_12 = arith.constant 0 : index
    %c0_13 = arith.constant 0 : index
    %16 = vector.load %arg4[%c0_12, %c0_13] : memref<128x128xbf16, #tpu.memory_space<vmem>>, vector<128x128xbf16>
    %cst_14 = arith.constant dense<0.000000e+00> : vector<8x128xf32>
    %17 = tpu.matmul %15, %16, %cst_14 {dimension_numbers = #tpu.dot_dimension_numbers<[1], [0], [0], [1], [0, 0, 1, 1], [], []>} : vector<8x128xbf16>, vector<128x128xbf16>, vector<8x128xf32> -> vector<8x128xf32>
    %18 = arith.addf %14, %17 : vector<8x128xf32>
    %19 = math.tanh %18 : vector<8x128xf32>
    %20 = arith.index_cast %12 : i32 to index
    %c0_15 = arith.constant 0 : index
    %21 = vector.load %arg8[%20, %c0_15] : memref<64x128xf32, #tpu.memory_space<vmem>>, vector<8x128xf32>
    tpu.vector_store %arg8[%20, %c0_15], %19 {strides = array<i32>} : memref<64x128xf32, #tpu.memory_space<vmem>>, vector<8x128xf32>,
    %c1_i32 = arith.constant 1 : i32
    %c8_i32_16 = arith.constant 8 : i32
    %22 = arith.muli %c1_i32, %c8_i32_16 : i32
    %23 = tpu.assume_multiple %22, 8 : i32
    %24 = arith.index_cast %23 : i32 to index
    %c0_17 = arith.constant 0 : index
    %25 = vector.load %arg8[%24, %c0_17] : memref<64x128xf32, #tpu.memory_space<vmem>>, vector<8x128xf32>
    %26 = arith.truncf %19 : vector<8x128xf32> to vector<8x128xbf16>
    %c0_18 = arith.constant 0 : index
    %c0_19 = arith.constant 0 : index
    %27 = vector.load %arg4[%c0_18, %c0_19] : memref<128x128xbf16, #tpu.memory_space<vmem>>, vector<128x128xbf16>
    %cst_20 = arith.constant dense<0.000000e+00> : vector<8x128xf32>
    %28 = tpu.matmul %26, %27, %cst_20 {dimension_numbers = #tpu.dot_dimension_numbers<[1], [0], [0], [1], [0, 0, 1, 1], [], []>} : vector<8x128xbf16>, vector<128x128xbf16>, vector<8x128xf32> -> vector<8x128xf32>
    %29 = arith.addf %25, %28 : vector<8x128xf32>
    %30 = math.tanh %29 : vector<8x128xf32>
    %31 = arith.index_cast %23 : i32 to index
    %c0_21 = arith.constant 0 : index
    %32 = vector.load %arg8[%31, %c0_21] : memref<64x128xf32, #tpu.memory_space<vmem>>, vector<8x128xf32>
    tpu.vector_store %arg8[%31, %c0_21], %30 {strides = array<i32>} : memref<64x128xf32, #tpu.memory_space<vmem>>, vector<8x128xf32>,
    %c2_i32 = arith.constant 2 : i32
    %c8_i32_22 = arith.constant 8 : i32
    %33 = arith.muli %c2_i32, %c8_i32_22 : i32
    %34 = tpu.assume_multiple %33, 8 : i32
    %35 = arith.index_cast %34 : i32 to index
    %c0_23 = arith.constant 0 : index
    %36 = vector.load %arg8[%35, %c0_23] : memref<64x128xf32, #tpu.memory_space<vmem>>, vector<8x128xf32>
    %37 = arith.truncf %30 : vector<8x128xf32> to vector<8x128xbf16>
    %c0_24 = arith.constant 0 : index
    %c0_25 = arith.constant 0 : index
    %38 = vector.load %arg4[%c0_24, %c0_25] : memref<128x128xbf16, #tpu.memory_space<vmem>>, vector<128x128xbf16>
    %cst_26 = arith.constant dense<0.000000e+00> : vector<8x128xf32>
    %39 = tpu.matmul %37, %38, %cst_26 {dimension_numbers = #tpu.dot_dimension_numbers<[1], [0], [0], [1], [0, 0, 1, 1], [], []>} : vector<8x128xbf16>, vector<128x128xbf16>, vector<8x128xf32> -> vector<8x128xf32>
    %40 = arith.addf %36, %39 : vector<8x128xf32>
    %41 = math.tanh %40 : vector<8x128xf32>
    %42 = arith.index_cast %34 : i32 to index
    %c0_27 = arith.constant 0 : index
    %43 = vector.load %arg8[%42, %c0_27] : memref<64x128xf32, #tpu.memory_space<vmem>>, vector<8x128xf32>
    tpu.vector_store %arg8[%42, %c0_27], %41 {strides = array<i32>} : memref<64x128xf32, #tpu.memory_space<vmem>>, vector<8x128xf32>,
    %c3_i32 = arith.constant 3 : i32
    %c8_i32_28 = arith.constant 8 : i32
    %44 = arith.muli %c3_i32, %c8_i32_28 : i32
    %45 = tpu.assume_multiple %44, 8 : i32
    %46 = arith.index_cast %45 : i32 to index
    %c0_29 = arith.constant 0 : index
    %47 = vector.load %arg8[%46, %c0_29] : memref<64x128xf32, #tpu.memory_space<vmem>>, vector<8x128xf32>
    %48 = arith.truncf %41 : vector<8x128xf32> to vector<8x128xbf16>
    %c0_30 = arith.constant 0 : index
    %c0_31 = arith.constant 0 : index
    %49 = vector.load %arg4[%c0_30, %c0_31] : memref<128x128xbf16, #tpu.memory_space<vmem>>, vector<128x128xbf16>
    %cst_32 = arith.constant dense<0.000000e+00> : vector<8x128xf32>
    %50 = tpu.matmul %48, %49, %cst_32 {dimension_numbers = #tpu.dot_dimension_numbers<[1], [0], [0], [1], [0, 0, 1, 1], [], []>} : vector<8x128xbf16>, vector<128x128xbf16>, vector<8x128xf32> -> vector<8x128xf32>
    %51 = arith.addf %47, %50 : vector<8x128xf32>
    %52 = math.tanh %51 : vector<8x128xf32>
    %53 = arith.index_cast %45 : i32 to index
    %c0_33 = arith.constant 0 : index
    %54 = vector.load %arg8[%53, %c0_33] : memref<64x128xf32, #tpu.memory_space<vmem>>, vector<8x128xf32>
    tpu.vector_store %arg8[%53, %c0_33], %52 {strides = array<i32>} : memref<64x128xf32, #tpu.memory_space<vmem>>, vector<8x128xf32>,
    %c4_i32 = arith.constant 4 : i32
    %c8_i32_34 = arith.constant 8 : i32
    %55 = arith.muli %c4_i32, %c8_i32_34 : i32
    %56 = tpu.assume_multiple %55, 8 : i32
    %57 = arith.index_cast %56 : i32 to index
    %c0_35 = arith.constant 0 : index
    %58 = vector.load %arg8[%57, %c0_35] : memref<64x128xf32, #tpu.memory_space<vmem>>, vector<8x128xf32>
    %59 = arith.truncf %52 : vector<8x128xf32> to vector<8x128xbf16>
    %c0_36 = arith.constant 0 : index
    %c0_37 = arith.constant 0 : index
    %60 = vector.load %arg4[%c0_36, %c0_37] : memref<128x128xbf16, #tpu.memory_space<vmem>>, vector<128x128xbf16>
    %cst_38 = arith.constant dense<0.000000e+00> : vector<8x128xf32>
    %61 = tpu.matmul %59, %60, %cst_38 {dimension_numbers = #tpu.dot_dimension_numbers<[1], [0], [0], [1], [0, 0, 1, 1], [], []>} : vector<8x128xbf16>, vector<128x128xbf16>, vector<8x128xf32> -> vector<8x128xf32>
    %62 = arith.addf %58, %61 : vector<8x128xf32>
    %63 = math.tanh %62 : vector<8x128xf32>
    %64 = arith.index_cast %56 : i32 to index
    %c0_39 = arith.constant 0 : index
    %65 = vector.load %arg8[%64, %c0_39] : memref<64x128xf32, #tpu.memory_space<vmem>>, vector<8x128xf32>
    tpu.vector_store %arg8[%64, %c0_39], %63 {strides = array<i32>} : memref<64x128xf32, #tpu.memory_space<vmem>>, vector<8x128xf32>,
    %c5_i32 = arith.constant 5 : i32
    %c8_i32_40 = arith.constant 8 : i32
    %66 = arith.muli %c5_i32, %c8_i32_40 : i32
    %67 = tpu.assume_multiple %66, 8 : i32
    %68 = arith.index_cast %67 : i32 to index
    %c0_41 = arith.constant 0 : index
    %69 = vector.load %arg8[%68, %c0_41] : memref<64x128xf32, #tpu.memory_space<vmem>>, vector<8x128xf32>
    %70 = arith.truncf %63 : vector<8x128xf32> to vector<8x128xbf16>
    %c0_42 = arith.constant 0 : index
    %c0_43 = arith.constant 0 : index
    %71 = vector.load %arg4[%c0_42, %c0_43] : memref<128x128xbf16, #tpu.memory_space<vmem>>, vector<128x128xbf16>
    %cst_44 = arith.constant dense<0.000000e+00> : vector<8x128xf32>
    %72 = tpu.matmul %70, %71, %cst_44 {dimension_numbers = #tpu.dot_dimension_numbers<[1], [0], [0], [1], [0, 0, 1, 1], [], []>} : vector<8x128xbf16>, vector<128x128xbf16>, vector<8x128xf32> -> vector<8x128xf32>
    %73 = arith.addf %69, %72 : vector<8x128xf32>
    %74 = math.tanh %73 : vector<8x128xf32>
    %75 = arith.index_cast %67 : i32 to index
    %c0_45 = arith.constant 0 : index
    %76 = vector.load %arg8[%75, %c0_45] : memref<64x128xf32, #tpu.memory_space<vmem>>, vector<8x128xf32>
    tpu.vector_store %arg8[%75, %c0_45], %74 {strides = array<i32>} : memref<64x128xf32, #tpu.memory_space<vmem>>, vector<8x128xf32>,
    %c6_i32 = arith.constant 6 : i32
    %c8_i32_46 = arith.constant 8 : i32
    %77 = arith.muli %c6_i32, %c8_i32_46 : i32
    %78 = tpu.assume_multiple %77, 8 : i32
    %79 = arith.index_cast %78 : i32 to index
    %c0_47 = arith.constant 0 : index
    %80 = vector.load %arg8[%79, %c0_47] : memref<64x128xf32, #tpu.memory_space<vmem>>, vector<8x128xf32>
    %81 = arith.truncf %74 : vector<8x128xf32> to vector<8x128xbf16>
    %c0_48 = arith.constant 0 : index
    %c0_49 = arith.constant 0 : index
    %82 = vector.load %arg4[%c0_48, %c0_49] : memref<128x128xbf16, #tpu.memory_space<vmem>>, vector<128x128xbf16>
    %cst_50 = arith.constant dense<0.000000e+00> : vector<8x128xf32>
    %83 = tpu.matmul %81, %82, %cst_50 {dimension_numbers = #tpu.dot_dimension_numbers<[1], [0], [0], [1], [0, 0, 1, 1], [], []>} : vector<8x128xbf16>, vector<128x128xbf16>, vector<8x128xf32> -> vector<8x128xf32>
    %84 = arith.addf %80, %83 : vector<8x128xf32>
    %85 = math.tanh %84 : vector<8x128xf32>
    %86 = arith.index_cast %78 : i32 to index
    %c0_51 = arith.constant 0 : index
    %87 = vector.load %arg8[%86, %c0_51] : memref<64x128xf32, #tpu.memory_space<vmem>>, vector<8x128xf32>
    tpu.vector_store %arg8[%86, %c0_51], %85 {strides = array<i32>} : memref<64x128xf32, #tpu.memory_space<vmem>>, vector<8x128xf32>,
    %c7_i32 = arith.constant 7 : i32
    %c8_i32_52 = arith.constant 8 : i32
    %88 = arith.muli %c7_i32, %c8_i32_52 : i32
    %89 = tpu.assume_multiple %88, 8 : i32
    %90 = arith.index_cast %89 : i32 to index
    %c0_53 = arith.constant 0 : index
    %91 = vector.load %arg8[%90, %c0_53] : memref<64x128xf32, #tpu.memory_space<vmem>>, vector<8x128xf32>
    %92 = arith.truncf %85 : vector<8x128xf32> to vector<8x128xbf16>
    %c0_54 = arith.constant 0 : index
    %c0_55 = arith.constant 0 : index
    %93 = vector.load %arg4[%c0_54, %c0_55] : memref<128x128xbf16, #tpu.memory_space<vmem>>, vector<128x128xbf16>
    %cst_56 = arith.constant dense<0.000000e+00> : vector<8x128xf32>
    %94 = tpu.matmul %92, %93, %cst_56 {dimension_numbers = #tpu.dot_dimension_numbers<[1], [0], [0], [1], [0, 0, 1, 1], [], []>} : vector<8x128xbf16>, vector<128x128xbf16>, vector<8x128xf32> -> vector<8x128xf32>
    %95 = arith.addf %91, %94 : vector<8x128xf32>
    %96 = math.tanh %95 : vector<8x128xf32>
    %97 = arith.index_cast %89 : i32 to index
    %c0_57 = arith.constant 0 : index
    %98 = vector.load %arg8[%97, %c0_57] : memref<64x128xf32, #tpu.memory_space<vmem>>, vector<8x128xf32>
    tpu.vector_store %arg8[%97, %c0_57], %96 {strides = array<i32>} : memref<64x128xf32, #tpu.memory_space<vmem>>, vector<8x128xf32>,
    %c8_i32_58 = arith.constant 8 : i32
    %c0_59 = arith.constant 0 : index
    %c0_60 = arith.constant 0 : index
    %99 = vector.load %arg7[%c0_59, %c0_60] : memref<8x128xf32, #tpu.memory_space<vmem>>, vector<8x128xf32>
    tpu.vector_store %arg7[%c0_59, %c0_60], %96 {strides = array<i32>} : memref<8x128xf32, #tpu.memory_space<vmem>>, vector<8x128xf32>,
    %c0_61 = arith.constant 0 : index
    %c0_62 = arith.constant 0 : index
    %100 = vector.load %arg8[%c0_61, %c0_62] : memref<64x128xf32, #tpu.memory_space<vmem>>, vector<64x128xf32>
    %101 = arith.truncf %100 : vector<64x128xf32> to vector<64x128xbf16>
    %c0_63 = arith.constant 0 : index
    %c0_64 = arith.constant 0 : index
    %102 = vector.load %arg6[%c0_63, %c0_64] : memref<64x128xbf16, #tpu.memory_space<vmem>>, vector<64x128xbf16>
    tpu.vector_store %arg6[%c0_63, %c0_64], %101 {strides = array<i32>} : memref<64x128xbf16, #tpu.memory_space<vmem>>, vector<64x128xbf16>,
    return
  }
  func.func @transform_0(%arg0: i32) -> (i32, i32) {
    %c0_i32 = arith.constant 0 : i32
    %c0_i32_0 = arith.constant 0 : i32
    return %arg0, %c0_i32 : i32, i32
  }
  func.func @transform_1(%arg0: i32) -> (i32, i32) {
    %c0_i32 = arith.constant 0 : i32
    %c0_i32_0 = arith.constant 0 : i32
    %c0_i32_1 = arith.constant 0 : i32
    return %c0_i32, %c0_i32_0 : i32, i32
  }
  func.func @transform_2(%arg0: i32) -> (i32, i32) {
    %c0_i32 = arith.constant 0 : i32
    %c0_i32_0 = arith.constant 0 : i32
    %c0_i32_1 = arith.constant 0 : i32
    return %c0_i32, %c0_i32_0 : i32, i32
  }
  func.func @transform_3(%arg0: i32) -> (i32, i32) {
    %c0_i32 = arith.constant 0 : i32
    %c0_i32_0 = arith.constant 0 : i32
    %c0_i32_1 = arith.constant 0 : i32
    return %c0_i32, %c0_i32_0 : i32, i32
  }
  func.func @transform_4(%arg0: i32) -> (i32, i32) {
    %c0_i32 = arith.constant 0 : i32
    %c0_i32_0 = arith.constant 0 : i32
    %c0_i32_1 = arith.constant 0 : i32
    return %c0_i32, %c0_i32_0 : i32, i32
  }
  func.func @transform_5(%arg0: i32) -> (i32, i32) {
    %c0_i32 = arith.constant 0 : i32
    %c0_i32_0 = arith.constant 0 : i32
    return %arg0, %c0_i32 : i32, i32
  }
}

</mosaic_0001>

<llo_original>
// kernel: rnn_model_forward.3
$region0: #{rnn_model_forward.3}
  #allocation0 [shape = 'u32[]', space=smem, size = 0x4, offset = 0x4, fixed_abs, tag = 'smem constant byte address 0x4 - core index']
  #allocation1 [shape = 'u32[144,128]{1,0:T(1,128)}', space=vmem, size = 0x12000, scoped, tag = 'internal scratch']
  #allocation2 [shape = 'f32[8,128]{1,0:T(8,128)}', space=vmem, size = 0x1000, scoped, tag = 'scratch operand']
  #allocation3 [shape = 'f32[64,128]{1,0:T(8,128)}', space=vmem, size = 0x8000, scoped, tag = 'scratch operand']
  %s0 = inlined_call_operand.vmem [shape: bf16[64,128], index: 0, kind: input, shape index: {}]
  %s1 = inlined_call_operand.vmem [shape: f32[8,128], index: 1, kind: input, shape index: {}]
  %s2 = inlined_call_operand.vmem [shape: bf16[128,128], index: 2, kind: input, shape index: {}]
  %s3 = inlined_call_operand.vmem [shape: bf16[128,128], index: 3, kind: input, shape index: {}]
  %s4 = inlined_call_operand.vmem [shape: f32[1,128], index: 4, kind: input, shape index: {}]
  %s5 = inlined_call_operand.vmem [shape: bf16[64,128], index: 5, kind: output, shape index: {}]
  %s6 = sld [smem:[#allocation0]]
  $region34: #{rnn_model_forward.3} parent=0
    _
  %s8 = ssub.s32 1, %s6
  %s9 = scalar_select 0, %s8, %s6
  // Predicated region
  $region2: #{rnn_model_forward.3} parent=0 // pred_check
    _
  $region3: #{rnn_model_forward.3} parent=0 // pred_check_branch
    %11 = sbr.rel (0) target = $region5
  $region4: #{rnn_model_forward.3} parent=0 // pred_region
    _
  $region5: #{rnn_model_forward.3} parent=0 // pred_fallthru
    _
  // Predicated region
  $region6: #{rnn_model_forward.3} parent=0 // pred_check
    _
  $region7: #{rnn_model_forward.3} parent=0 // pred_check_branch
    %13 = sbr.rel (0) target = $region9
  $region8: #{rnn_model_forward.3} parent=0 // pred_region
    _
  $region9: #{rnn_model_forward.3} parent=0 // pred_fallthru
    _
  // Predicated region
  $region10: #{rnn_model_forward.3} parent=0 // pred_check
    _
  $region11: #{rnn_model_forward.3} parent=0 // pred_check_branch
    %15 = sbr.rel (0) target = $region13
  $region12: #{rnn_model_forward.3} parent=0 // pred_region
    _
  $region13: #{rnn_model_forward.3} parent=0 // pred_fallthru
    _
  // Predicated region
  $region14: #{rnn_model_forward.3} parent=0 // pred_check
    _
  $region15: #{rnn_model_forward.3} parent=0 // pred_check_branch
    %17 = sbr.rel (0) target = $region17
  $region16: #{rnn_model_forward.3} parent=0 // pred_region
    _
  $region17: #{rnn_model_forward.3} parent=0 // pred_fallthru
    _
  // Predicated region
  $region18: #{rnn_model_forward.3} parent=0 // pred_check
    _
  $region19: #{rnn_model_forward.3} parent=0 // pred_check_branch
    %19 = sbr.rel (0) target = $region21
  $region20: #{rnn_model_forward.3} parent=0 // pred_region
    _
  $region21: #{rnn_model_forward.3} parent=0 // pred_fallthru
    _
  %p21 = scmp.eq.s32.totalorder 0, 0
  // Predicated region
  $region22: #{rnn_model_forward.3} parent=0 // pred_check
    %p22 = pneg %p21
  $region23: #{rnn_model_forward.3} parent=0 // pred_check_branch
    %24 = sbr.rel (%p22) target = $region25
  $region24: #{rnn_model_forward.3} parent=0 // pred_region
    %v25 = vld [vmem:[%s1] sm:$0xff]
    %26 = vst [vmem:[#allocation2] sm:$0xff] %v25
  $region25: #{rnn_model_forward.3} parent=0 // pred_fallthru
    _
  %v27 = vld [vmem:[%s0] sm:$0xf]
  %v28 = vld [vmem:[%s0 + $0x4] sm:$0xf]
  %v29 = vld [vmem:[%s0 + $0x8] sm:$0xf]
  %v30 = vld [vmem:[%s0 + $0xc] sm:$0xf]
  %v31 = vld [vmem:[%s0 + $0x10] sm:$0xf]
  %v32 = vld [vmem:[%s0 + $0x14] sm:$0xf]
  %v33 = vld [vmem:[%s0 + $0x18] sm:$0xf]
  %v34 = vld [vmem:[%s0 + $0x1c] sm:$0xf]
  %v35 = vld [vmem:[%s2] sm:$0xf]
  %v36 = vld [vmem:[%s2 + $0x4] sm:$0xf]
  %v37 = vld [vmem:[%s2 + $0x8] sm:$0xf]
  %v38 = vld [vmem:[%s2 + $0xc] sm:$0xf]
  %v39 = vld [vmem:[%s2 + $0x10] sm:$0xf]
  %v40 = vld [vmem:[%s2 + $0x14] sm:$0xf]
  %v41 = vld [vmem:[%s2 + $0x18] sm:$0xf]
  %v42 = vld [vmem:[%s2 + $0x1c] sm:$0xf]
  %v43 = vld [vmem:[%s2 + $0x20] sm:$0xf]
  %v44 = vld [vmem:[%s2 + $0x24] sm:$0xf]
  %v45 = vld [vmem:[%s2 + $0x28] sm:$0xf]
  %v46 = vld [vmem:[%s2 + $0x2c] sm:$0xf]
  %v47 = vld [vmem:[%s2 + $0x30] sm:$0xf]
  %v48 = vld [vmem:[%s2 + $0x34] sm:$0xf]
  %v49 = vld [vmem:[%s2 + $0x38] sm:$0xf]
  %v50 = vld [vmem:[%s2 + $0x3c] sm:$0xf]
  %v51 = vld [vmem:[%s4] sm:$0x1]
  %v53 = vlaneseq
  %v54 = vshrl.u32 %v53, 7
  %v55 = vsub.s32 0, %v54
  %v56 = vrot.slane %v51, %v55
  %v66 = vunpack.c.l.b16 %v27
  %v67 = vunpack.c.l.b16 %v28
  %v68 = vunpack.c.l.b16 %v29
  %v69 = vunpack.c.l.b16 %v30
  %v70 = vunpack.c.l.b16 %v31
  %v71 = vunpack.c.l.b16 %v32
  %v72 = vunpack.c.l.b16 %v33
  %v73 = vunpack.c.l.b16 %v34
  %v74 = vpack.c.b16 %v67, %v66
  %v75 = vpack.c.b16 %v69, %v68
  %v76 = vpack.c.b16 %v71, %v70
  %v77 = vpack.c.b16 %v73, %v72
  %v98 = vunpack.c.l.b16 %v35
  %v99 = vunpack.c.l.b16 %v36
  %v100 = vunpack.c.l.b16 %v37
  %v101 = vunpack.c.l.b16 %v38
  %v102 = vunpack.c.l.b16 %v39
  %v103 = vunpack.c.l.b16 %v40
  %v104 = vunpack.c.l.b16 %v41
  %v105 = vunpack.c.l.b16 %v42
  %v106 = vunpack.c.l.b16 %v43
  %v107 = vunpack.c.l.b16 %v44
  %v108 = vunpack.c.l.b16 %v45
  %v109 = vunpack.c.l.b16 %v46
  %v110 = vunpack.c.l.b16 %v47
  %v111 = vunpack.c.l.b16 %v48
  %v112 = vunpack.c.l.b16 %v49
  %v113 = vunpack.c.l.b16 %v50
  %v114 = vpack.c.b16 %v99, %v98
  %v115 = vpack.c.b16 %v101, %v100
  %v116 = vpack.c.b16 %v103, %v102
  %v117 = vpack.c.b16 %v105, %v104
  %v118 = vpack.c.b16 %v107, %v106
  %v119 = vpack.c.b16 %v109, %v108
  %v120 = vpack.c.b16 %v111, %v110
  %v121 = vpack.c.b16 %v113, %v112
  %130 = vmatprep.subr.bf16.mxu0 0
  %131 = vmatpush1.bf16.msra.mxu0 %v114
  %132 = vmatprep.subr.bf16.mxu0 0
  %133 = vmatpush1.bf16.msra.mxu0 %v115
  %134 = vmatprep.subr.bf16.mxu0 0
  %135 = vmatpush1.bf16.msra.mxu0 %v116
  %136 = vmatprep.subr.bf16.mxu0 0
  %137 = vmatpush1.bf16.msra.mxu0 %v117
  %138 = vmatprep.subr.bf16.mxu0 0
  %139 = vmatpush1.bf16.msra.mxu0 %v118
  %140 = vmatprep.subr.bf16.mxu0 0
  %141 = vmatpush1.bf16.msra.mxu0 %v119
  %142 = vmatprep.subr.bf16.mxu0 0
  %143 = vmatpush1.bf16.msra.mxu0 %v120
  %144 = vmatprep.subr.bf16.mxu0 0
  %145 = vmatpush1.bf16.msra.mxu0 %v121
  %146 = vmatprep.subr.bf16.mxu0 0
  %147 = vmatpush1.bf16.msra.mxu0 0
  %148 = vmatprep.subr.bf16.mxu0 0
  %149 = vmatpush1.bf16.msra.mxu0 0
  %150 = vmatprep.subr.bf16.mxu0 0
  %151 = vmatpush1.bf16.msra.mxu0 0
  %152 = vmatprep.subr.bf16.mxu0 0
  %153 = vmatpush1.bf16.msra.mxu0 0
  %154 = vmatprep.subr.bf16.mxu0 0
  %155 = vmatpush1.bf16.msra.mxu0 0
  %156 = vmatprep.subr.bf16.mxu0 0
  %157 = vmatpush1.bf16.msra.mxu0 0
  %158 = vmatprep.subr.bf16.mxu0 0
  %159 = vmatpush1.bf16.msra.mxu0 0
  %160 = vmatprep.subr.bf16.mxu0 0
  %161 = vmatpush1.bf16.msra.mxu0 0
  %162 = vmatprep.mubr.bf16.mxu0 0
  %163 = vmatmul.mubr.bf16.gmra.mrb[0].mxu0 %v74
  %v164 = vpop.f32.mrb[0].mxu0
  %v165 = vadd.f32 %v56, %v164
  %v166 = vpop.f32.mrb[0].mxu0
  %v167 = vpop.f32.mrb[0].mxu0
  %v168 = vadd.f32 %v56, %v167
  %v169 = vpop.f32.mrb[0].mxu0
  %170 = vmatprep.mubr.bf16.mxu0 0
  %171 = vmatmul.mubr.bf16.gmra.mrb[0].mxu0 %v75
  %v172 = vpop.f32.mrb[0].mxu0
  %v173 = vadd.f32 %v56, %v172
  %v174 = vpop.f32.mrb[0].mxu0
  %v175 = vpop.f32.mrb[0].mxu0
  %v176 = vadd.f32 %v56, %v175
  %v177 = vpop.f32.mrb[0].mxu0
  %178 = vmatprep.mubr.bf16.mxu0 0
  %179 = vmatmul.mubr.bf16.gmra.mrb[0].mxu0 %v76
  %v180 = vpop.f32.mrb[0].mxu0
  %v181 = vadd.f32 %v56, %v180
  %v182 = vpop.f32.mrb[0].mxu0
  %v183 = vpop.f32.mrb[0].mxu0
  %v184 = vadd.f32 %v56, %v183
  %v185 = vpop.f32.mrb[0].mxu0
  %186 = vmatprep.mubr.bf16.mxu0 0
  %187 = vmatmul.mubr.bf16.gmra.mrb[0].mxu0 %v77
  %v188 = vpop.f32.mrb[0].mxu0
  %v189 = vadd.f32 %v56, %v188
  %v190 = vpop.f32.mrb[0].mxu0
  %v191 = vpop.f32.mrb[0].mxu0
  %v192 = vadd.f32 %v56, %v191
  %v193 = vpop.f32.mrb[0].mxu0
  %194 = vdwg.mxu0
  %195 = vst [vmem:[#allocation3] sm:$0xff] %v165
  %196 = vst [vmem:[#allocation3 + $0x8] sm:$0xff] %v168
  %197 = vst [vmem:[#allocation3 + $0x10] sm:$0xff] %v173
  %198 = vst [vmem:[#allocation3 + $0x18] sm:$0xff] %v176
  %199 = vst [vmem:[#allocation3 + $0x20] sm:$0xff] %v181
  %200 = vst [vmem:[#allocation3 + $0x28] sm:$0xff] %v184
  %201 = vst [vmem:[#allocation3 + $0x30] sm:$0xff] %v189
  %202 = vst [vmem:[#allocation3 + $0x38] sm:$0xff] %v192
  %v203 = vld [vmem:[#allocation2] sm:$0xff]
  %v204 = vld [vmem:[#allocation3] sm:$0xff]
  %v205 = vpack.c.bf16 %v203, %v203
  %v206 = vld [vmem:[%s3] sm:$0xf]
  %v207 = vld [vmem:[%s3 + $0x4] sm:$0xf]
  %v208 = vld [vmem:[%s3 + $0x8] sm:$0xf]
  %v209 = vld [vmem:[%s3 + $0xc] sm:$0xf]
  %v210 = vld [vmem:[%s3 + $0x10] sm:$0xf]
  %v211 = vld [vmem:[%s3 + $0x14] sm:$0xf]
  %v212 = vld [vmem:[%s3 + $0x18] sm:$0xf]
  %v213 = vld [vmem:[%s3 + $0x1c] sm:$0xf]
  %v214 = vld [vmem:[%s3 + $0x20] sm:$0xf]
  %v215 = vld [vmem:[%s3 + $0x24] sm:$0xf]
  %v216 = vld [vmem:[%s3 + $0x28] sm:$0xf]
  %v217 = vld [vmem:[%s3 + $0x2c] sm:$0xf]
  %v218 = vld [vmem:[%s3 + $0x30] sm:$0xf]
  %v219 = vld [vmem:[%s3 + $0x34] sm:$0xf]
  %v220 = vld [vmem:[%s3 + $0x38] sm:$0xf]
  %v221 = vld [vmem:[%s3 + $0x3c] sm:$0xf]
  %v238 = vunpack.c.l.b16 %v206
  %v239 = vunpack.c.l.b16 %v207
  %v240 = vunpack.c.l.b16 %v208
  %v241 = vunpack.c.l.b16 %v209
  %v242 = vunpack.c.l.b16 %v210
  %v243 = vunpack.c.l.b16 %v211
  %v244 = vunpack.c.l.b16 %v212
  %v245 = vunpack.c.l.b16 %v213
  %v246 = vunpack.c.l.b16 %v214
  %v247 = vunpack.c.l.b16 %v215
  %v248 = vunpack.c.l.b16 %v216
  %v249 = vunpack.c.l.b16 %v217
  %v250 = vunpack.c.l.b16 %v218
  %v251 = vunpack.c.l.b16 %v219
  %v252 = vunpack.c.l.b16 %v220
  %v253 = vunpack.c.l.b16 %v221
  %v254 = vpack.c.b16 %v239, %v238
  %v255 = vpack.c.b16 %v241, %v240
  %v256 = vpack.c.b16 %v243, %v242
  %v257 = vpack.c.b16 %v245, %v244
  %v258 = vpack.c.b16 %v247, %v246
  %v259 = vpack.c.b16 %v249, %v248
  %v260 = vpack.c.b16 %v251, %v250
  %v261 = vpack.c.b16 %v253, %v252
  %270 = vmatprep.subr.bf16.mxu0 0
  %271 = vmatpush1.bf16.msra.mxu0 %v254
  %272 = vmatprep.subr.bf16.mxu0 0
  %273 = vmatpush1.bf16.msra.mxu0 %v255
  %274 = vmatprep.subr.bf16.mxu0 0
  %275 = vmatpush1.bf16.msra.mxu0 %v256
  %276 = vmatprep.subr.bf16.mxu0 0
  %277 = vmatpush1.bf16.msra.mxu0 %v257
  %278 = vmatprep.subr.bf16.mxu0 0
  %279 = vmatpush1.bf16.msra.mxu0 %v258
  %280 = vmatprep.subr.bf16.mxu0 0
  %281 = vmatpush1.bf16.msra.mxu0 %v259
  %282 = vmatprep.subr.bf16.mxu0 0
  %283 = vmatpush1.bf16.msra.mxu0 %v260
  %284 = vmatprep.subr.bf16.mxu0 0
  %285 = vmatpush1.bf16.msra.mxu0 %v261
  %286 = vmatprep.subr.bf16.mxu0 0
  %287 = vmatpush1.bf16.msra.mxu0 0
  %288 = vmatprep.subr.bf16.mxu0 0
  %289 = vmatpush1.bf16.msra.mxu0 0
  %290 = vmatprep.subr.bf16.mxu0 0
  %291 = vmatpush1.bf16.msra.mxu0 0
  %292 = vmatprep.subr.bf16.mxu0 0
  %293 = vmatpush1.bf16.msra.mxu0 0
  %294 = vmatprep.subr.bf16.mxu0 0
  %295 = vmatpush1.bf16.msra.mxu0 0
  %296 = vmatprep.subr.bf16.mxu0 0
  %297 = vmatpush1.bf16.msra.mxu0 0
  %298 = vmatprep.subr.bf16.mxu0 0
  %299 = vmatpush1.bf16.msra.mxu0 0
  %300 = vmatprep.subr.bf16.mxu0 0
  %301 = vmatpush1.bf16.msra.mxu0 0
  %302 = vmatprep.mubr.bf16.mxu0 0
  %303 = vmatmul.mubr.bf16.gmra.mrb[0].mxu0 %v205
  %v304 = vpop.f32.mrb[0].mxu0
  %v305 = vadd.f32 0.0, %v304
  %v306 = vpop.f32.mrb[0].mxu0
  %v307 = vpop.f32.mrb[0].mxu0
  %v308 = vpop.f32.mrb[0].mxu0
  %309 = vdwg.mxu0
  %v310 = vadd.f32 %v204, %v305
  %v311 = vtanh.pop %v310
  %312 = vst [vmem:[#allocation3] sm:$0xff] %v311
  %s313 = scalar_lea.vmem [#allocation3], 8
  %v314 = vld [vmem:[%s313] sm:$0xff]
  %v315 = vpack.c.bf16 %v311, %v311
  %v316 = vld [vmem:[%s3] sm:$0xf]
  %v317 = vld [vmem:[%s3 + $0x4] sm:$0xf]
  %v318 = vld [vmem:[%s3 + $0x8] sm:$0xf]
  %v319 = vld [vmem:[%s3 + $0xc] sm:$0xf]
  %v320 = vld [vmem:[%s3 + $0x10] sm:$0xf]
  %v321 = vld [vmem:[%s3 + $0x14] sm:$0xf]
  %v322 = vld [vmem:[%s3 + $0x18] sm:$0xf]
  %v323 = vld [vmem:[%s3 + $0x1c] sm:$0xf]
  %v324 = vld [vmem:[%s3 + $0x20] sm:$0xf]
  %v325 = vld [vmem:[%s3 + $0x24] sm:$0xf]
  %v326 = vld [vmem:[%s3 + $0x28] sm:$0xf]
  %v327 = vld [vmem:[%s3 + $0x2c] sm:$0xf]
  %v328 = vld [vmem:[%s3 + $0x30] sm:$0xf]
  %v329 = vld [vmem:[%s3 + $0x34] sm:$0xf]
  %v330 = vld [vmem:[%s3 + $0x38] sm:$0xf]
  %v331 = vld [vmem:[%s3 + $0x3c] sm:$0xf]
  %v348 = vunpack.c.l.b16 %v316
  %v349 = vunpack.c.l.b16 %v317
  %v350 = vunpack.c.l.b16 %v318
  %v351 = vunpack.c.l.b16 %v319
  %v352 = vunpack.c.l.b16 %v320
  %v353 = vunpack.c.l.b16 %v321
  %v354 = vunpack.c.l.b16 %v322
  %v355 = vunpack.c.l.b16 %v323
  %v356 = vunpack.c.l.b16 %v324
  %v357 = vunpack.c.l.b16 %v325
  %v358 = vunpack.c.l.b16 %v326
  %v359 = vunpack.c.l.b16 %v327
  %v360 = vunpack.c.l.b16 %v328
  %v361 = vunpack.c.l.b16 %v329
  %v362 = vunpack.c.l.b16 %v330
  %v363 = vunpack.c.l.b16 %v331
  %v364 = vpack.c.b16 %v349, %v348
  %v365 = vpack.c.b16 %v351, %v350
  %v366 = vpack.c.b16 %v353, %v352
  %v367 = vpack.c.b16 %v355, %v354
  %v368 = vpack.c.b16 %v357, %v356
  %v369 = vpack.c.b16 %v359, %v358
  %v370 = vpack.c.b16 %v361, %v360
  %v371 = vpack.c.b16 %v363, %v362
  %380 = vmatprep.subr.bf16.mxu0 0
  %381 = vmatpush1.bf16.msra.mxu0 %v364
  %382 = vmatprep.subr.bf16.mxu0 0
  %383 = vmatpush1.bf16.msra.mxu0 %v365
  %384 = vmatprep.subr.bf16.mxu0 0
  %385 = vmatpush1.bf16.msra.mxu0 %v366
  %386 = vmatprep.subr.bf16.mxu0 0
  %387 = vmatpush1.bf16.msra.mxu0 %v367
  %388 = vmatprep.subr.bf16.mxu0 0
  %389 = vmatpush1.bf16.msra.mxu0 %v368
  %390 = vmatprep.subr.bf16.mxu0 0
  %391 = vmatpush1.bf16.msra.mxu0 %v369
  %392 = vmatprep.subr.bf16.mxu0 0
  %393 = vmatpush1.bf16.msra.mxu0 %v370
  %394 = vmatprep.subr.bf16.mxu0 0
  %395 = vmatpush1.bf16.msra.mxu0 %v371
  %396 = vmatprep.subr.bf16.mxu0 0
  %397 = vmatpush1.bf16.msra.mxu0 0
  %398 = vmatprep.subr.bf16.mxu0 0
  %399 = vmatpush1.bf16.msra.mxu0 0
  %400 = vmatprep.subr.bf16.mxu0 0
  %401 = vmatpush1.bf16.msra.mxu0 0
  %402 = vmatprep.subr.bf16.mxu0 0
  %403 = vmatpush1.bf16.msra.mxu0 0
  %404 = vmatprep.subr.bf16.mxu0 0
  %405 = vmatpush1.bf16.msra.mxu0 0
  %406 = vmatprep.subr.bf16.mxu0 0
  %407 = vmatpush1.bf16.msra.mxu0 0
  %408 = vmatprep.subr.bf16.mxu0 0
  %409 = vmatpush1.bf16.msra.mxu0 0
  %410 = vmatprep.subr.bf16.mxu0 0
  %411 = vmatpush1.bf16.msra.mxu0 0
  %412 = vmatprep.mubr.bf16.mxu0 0
  %413 = vmatmul.mubr.bf16.gmra.mrb[0].mxu0 %v315
  %v414 = vpop.f32.mrb[0].mxu0
  %v415 = vadd.f32 0.0, %v414
  %v416 = vpop.f32.mrb[0].mxu0
  %v417 = vpop.f32.mrb[0].mxu0
  %v418 = vpop.f32.mrb[0].mxu0
  %419 = vdwg.mxu0
  %v420 = vadd.f32 %v314, %v415
  %v421 = vtanh.pop %v420
  %422 = vst [vmem:[%s313] sm:$0xff] %v421
  %s423 = scalar_lea.vmem [#allocation3], 16
  %v424 = vld [vmem:[%s423] sm:$0xff]
  %v425 = vpack.c.bf16 %v421, %v421
  %v426 = vld [vmem:[%s3] sm:$0xf]
  %v427 = vld [vmem:[%s3 + $0x4] sm:$0xf]
  %v428 = vld [vmem:[%s3 + $0x8] sm:$0xf]
  %v429 = vld [vmem:[%s3 + $0xc] sm:$0xf]
  %v430 = vld [vmem:[%s3 + $0x10] sm:$0xf]
  %v431 = vld [vmem:[%s3 + $0x14] sm:$0xf]
  %v432 = vld [vmem:[%s3 + $0x18] sm:$0xf]
  %v433 = vld [vmem:[%s3 + $0x1c] sm:$0xf]
  %v434 = vld [vmem:[%s3 + $0x20] sm:$0xf]
  %v435 = vld [vmem:[%s3 + $0x24] sm:$0xf]
  %v436 = vld [vmem:[%s3 + $0x28] sm:$0xf]
  %v437 = vld [vmem:[%s3 + $0x2c] sm:$0xf]
  %v438 = vld [vmem:[%s3 + $0x30] sm:$0xf]
  %v439 = vld [vmem:[%s3 + $0x34] sm:$0xf]
  %v440 = vld [vmem:[%s3 + $0x38] sm:$0xf]
  %v441 = vld [vmem:[%s3 + $0x3c] sm:$0xf]
  %v458 = vunpack.c.l.b16 %v426
  %v459 = vunpack.c.l.b16 %v427
  %v460 = vunpack.c.l.b16 %v428
  %v461 = vunpack.c.l.b16 %v429
  %v462 = vunpack.c.l.b16 %v430
  %v463 = vunpack.c.l.b16 %v431
  %v464 = vunpack.c.l.b16 %v432
  %v465 = vunpack.c.l.b16 %v433
  %v466 = vunpack.c.l.b16 %v434
  %v467 = vunpack.c.l.b16 %v435
  %v468 = vunpack.c.l.b16 %v436
  %v469 = vunpack.c.l.b16 %v437
  %v470 = vunpack.c.l.b16 %v438
  %v471 = vunpack.c.l.b16 %v439
  %v472 = vunpack.c.l.b16 %v440
  %v473 = vunpack.c.l.b16 %v441
  %v474 = vpack.c.b16 %v459, %v458
  %v475 = vpack.c.b16 %v461, %v460
  %v476 = vpack.c.b16 %v463, %v462
  %v477 = vpack.c.b16 %v465, %v464
  %v478 = vpack.c.b16 %v467, %v466
  %v479 = vpack.c.b16 %v469, %v468
  %v480 = vpack.c.b16 %v471, %v470
  %v481 = vpack.c.b16 %v473, %v472
  %490 = vmatprep.subr.bf16.mxu0 0
  %491 = vmatpush1.bf16.msra.mxu0 %v474
  %492 = vmatprep.subr.bf16.mxu0 0
  %493 = vmatpush1.bf16.msra.mxu0 %v475
  %494 = vmatprep.subr.bf16.mxu0 0
  %495 = vmatpush1.bf16.msra.mxu0 %v476
  %496 = vmatprep.subr.bf16.mxu0 0
  %497 = vmatpush1.bf16.msra.mxu0 %v477
  %498 = vmatprep.subr.bf16.mxu0 0
  %499 = vmatpush1.bf16.msra.mxu0 %v478
  %500 = vmatprep.subr.bf16.mxu0 0
  %501 = vmatpush1.bf16.msra.mxu0 %v479
  %502 = vmatprep.subr.bf16.mxu0 0
  %503 = vmatpush1.bf16.msra.mxu0 %v480
  %504 = vmatprep.subr.bf16.mxu0 0
  %505 = vmatpush1.bf16.msra.mxu0 %v481
  %506 = vmatprep.subr.bf16.mxu0 0
  %507 = vmatpush1.bf16.msra.mxu0 0
  %508 = vmatprep.subr.bf16.mxu0 0
  %509 = vmatpush1.bf16.msra.mxu0 0
  %510 = vmatprep.subr.bf16.mxu0 0
  %511 = vmatpush1.bf16.msra.mxu0 0
  %512 = vmatprep.subr.bf16.mxu0 0
  %513 = vmatpush1.bf16.msra.mxu0 0
  %514 = vmatprep.subr.bf16.mxu0 0
  %515 = vmatpush1.bf16.msra.mxu0 0
  %516 = vmatprep.subr.bf16.mxu0 0
  %517 = vmatpush1.bf16.msra.mxu0 0
  %518 = vmatprep.subr.bf16.mxu0 0
  %519 = vmatpush1.bf16.msra.mxu0 0
  %520 = vmatprep.subr.bf16.mxu0 0
  %521 = vmatpush1.bf16.msra.mxu0 0
  %522 = vmatprep.mubr.bf16.mxu0 0
  %523 = vmatmul.mubr.bf16.gmra.mrb[0].mxu0 %v425
  %v524 = vpop.f32.mrb[0].mxu0
  %v525 = vadd.f32 0.0, %v524
  %v526 = vpop.f32.mrb[0].mxu0
  %v527 = vpop.f32.mrb[0].mxu0
  %v528 = vpop.f32.mrb[0].mxu0
  %529 = vdwg.mxu0
  %v530 = vadd.f32 %v424, %v525
  %v531 = vtanh.pop %v530
  %532 = vst [vmem:[%s423] sm:$0xff] %v531
  %s533 = scalar_lea.vmem [#allocation3], 24
  %v534 = vld [vmem:[%s533] sm:$0xff]
  %v535 = vpack.c.bf16 %v531, %v531
  %v536 = vld [vmem:[%s3] sm:$0xf]
  %v537 = vld [vmem:[%s3 + $0x4] sm:$0xf]
  %v538 = vld [vmem:[%s3 + $0x8] sm:$0xf]
  %v539 = vld [vmem:[%s3 + $0xc] sm:$0xf]
  %v540 = vld [vmem:[%s3 + $0x10] sm:$0xf]
  %v541 = vld [vmem:[%s3 + $0x14] sm:$0xf]
  %v542 = vld [vmem:[%s3 + $0x18] sm:$0xf]
  %v543 = vld [vmem:[%s3 + $0x1c] sm:$0xf]
  %v544 = vld [vmem:[%s3 + $0x20] sm:$0xf]
  %v545 = vld [vmem:[%s3 + $0x24] sm:$0xf]
  %v546 = vld [vmem:[%s3 + $0x28] sm:$0xf]
  %v547 = vld [vmem:[%s3 + $0x2c] sm:$0xf]
  %v548 = vld [vmem:[%s3 + $0x30] sm:$0xf]
  %v549 = vld [vmem:[%s3 + $0x34] sm:$0xf]
  %v550 = vld [vmem:[%s3 + $0x38] sm:$0xf]
  %v551 = vld [vmem:[%s3 + $0x3c] sm:$0xf]
  %v568 = vunpack.c.l.b16 %v536
  %v569 = vunpack.c.l.b16 %v537
  %v570 = vunpack.c.l.b16 %v538
  %v571 = vunpack.c.l.b16 %v539
  %v572 = vunpack.c.l.b16 %v540
  %v573 = vunpack.c.l.b16 %v541
  %v574 = vunpack.c.l.b16 %v542
  %v575 = vunpack.c.l.b16 %v543
  %v576 = vunpack.c.l.b16 %v544
  %v577 = vunpack.c.l.b16 %v545
  %v578 = vunpack.c.l.b16 %v546
  %v579 = vunpack.c.l.b16 %v547
  %v580 = vunpack.c.l.b16 %v548
  %v581 = vunpack.c.l.b16 %v549
  %v582 = vunpack.c.l.b16 %v550
  %v583 = vunpack.c.l.b16 %v551
  %v584 = vpack.c.b16 %v569, %v568
  %v585 = vpack.c.b16 %v571, %v570
  %v586 = vpack.c.b16 %v573, %v572
  %v587 = vpack.c.b16 %v575, %v574
  %v588 = vpack.c.b16 %v577, %v576
  %v589 = vpack.c.b16 %v579, %v578
  %v590 = vpack.c.b16 %v581, %v580
  %v591 = vpack.c.b16 %v583, %v582
  %600 = vmatprep.subr.bf16.mxu0 0
  %601 = vmatpush1.bf16.msra.mxu0 %v584
  %602 = vmatprep.subr.bf16.mxu0 0
  %603 = vmatpush1.bf16.msra.mxu0 %v585
  %604 = vmatprep.subr.bf16.mxu0 0
  %605 = vmatpush1.bf16.msra.mxu0 %v586
  %606 = vmatprep.subr.bf16.mxu0 0
  %607 = vmatpush1.bf16.msra.mxu0 %v587
  %608 = vmatprep.subr.bf16.mxu0 0
  %609 = vmatpush1.bf16.msra.mxu0 %v588
  %610 = vmatprep.subr.bf16.mxu0 0
  %611 = vmatpush1.bf16.msra.mxu0 %v589
  %612 = vmatprep.subr.bf16.mxu0 0
  %613 = vmatpush1.bf16.msra.mxu0 %v590
  %614 = vmatprep.subr.bf16.mxu0 0
  %615 = vmatpush1.bf16.msra.mxu0 %v591
  %616 = vmatprep.subr.bf16.mxu0 0
  %617 = vmatpush1.bf16.msra.mxu0 0
  %618 = vmatprep.subr.bf16.mxu0 0
  %619 = vmatpush1.bf16.msra.mxu0 0
  %620 = vmatprep.subr.bf16.mxu0 0
  %621 = vmatpush1.bf16.msra.mxu0 0
  %622 = vmatprep.subr.bf16.mxu0 0
  %623 = vmatpush1.bf16.msra.mxu0 0
  %624 = vmatprep.subr.bf16.mxu0 0
  %625 = vmatpush1.bf16.msra.mxu0 0
  %626 = vmatprep.subr.bf16.mxu0 0
  %627 = vmatpush1.bf16.msra.mxu0 0
  %628 = vmatprep.subr.bf16.mxu0 0
  %629 = vmatpush1.bf16.msra.mxu0 0
  %630 = vmatprep.subr.bf16.mxu0 0
  %631 = vmatpush1.bf16.msra.mxu0 0
  %632 = vmatprep.mubr.bf16.mxu0 0
  %633 = vmatmul.mubr.bf16.gmra.mrb[0].mxu0 %v535
  %v634 = vpop.f32.mrb[0].mxu0
  %v635 = vadd.f32 0.0, %v634
  %v636 = vpop.f32.mrb[0].mxu0
  %v637 = vpop.f32.mrb[0].mxu0
  %v638 = vpop.f32.mrb[0].mxu0
  %639 = vdwg.mxu0
  %v640 = vadd.f32 %v534, %v635
  %v641 = vtanh.pop %v640
  %642 = vst [vmem:[%s533] sm:$0xff] %v641
  %s643 = scalar_lea.vmem [#allocation3], 32
  %v644 = vld [vmem:[%s643] sm:$0xff]
  %v645 = vpack.c.bf16 %v641, %v641
  %v646 = vld [vmem:[%s3] sm:$0xf]
  %v647 = vld [vmem:[%s3 + $0x4] sm:$0xf]
  %v648 = vld [vmem:[%s3 + $0x8] sm:$0xf]
  %v649 = vld [vmem:[%s3 + $0xc] sm:$0xf]
  %v650 = vld [vmem:[%s3 + $0x10] sm:$0xf]
  %v651 = vld [vmem:[%s3 + $0x14] sm:$0xf]
  %v652 = vld [vmem:[%s3 + $0x18] sm:$0xf]
  %v653 = vld [vmem:[%s3 + $0x1c] sm:$0xf]
  %v654 = vld [vmem:[%s3 + $0x20] sm:$0xf]
  %v655 = vld [vmem:[%s3 + $0x24] sm:$0xf]
  %v656 = vld [vmem:[%s3 + $0x28] sm:$0xf]
  %v657 = vld [vmem:[%s3 + $0x2c] sm:$0xf]
  %v658 = vld [vmem:[%s3 + $0x30] sm:$0xf]
  %v659 = vld [vmem:[%s3 + $0x34] sm:$0xf]
  %v660 = vld [vmem:[%s3 + $0x38] sm:$0xf]
  %v661 = vld [vmem:[%s3 + $0x3c] sm:$0xf]
  %v678 = vunpack.c.l.b16 %v646
  %v679 = vunpack.c.l.b16 %v647
  %v680 = vunpack.c.l.b16 %v648
  %v681 = vunpack.c.l.b16 %v649
  %v682 = vunpack.c.l.b16 %v650
  %v683 = vunpack.c.l.b16 %v651
  %v684 = vunpack.c.l.b16 %v652
  %v685 = vunpack.c.l.b16 %v653
  %v686 = vunpack.c.l.b16 %v654
  %v687 = vunpack.c.l.b16 %v655
  %v688 = vunpack.c.l.b16 %v656
  %v689 = vunpack.c.l.b16 %v657
  %v690 = vunpack.c.l.b16 %v658
  %v691 = vunpack.c.l.b16 %v659
  %v692 = vunpack.c.l.b16 %v660
  %v693 = vunpack.c.l.b16 %v661
  %v694 = vpack.c.b16 %v679, %v678
  %v695 = vpack.c.b16 %v681, %v680
  %v696 = vpack.c.b16 %v683, %v682
  %v697 = vpack.c.b16 %v685, %v684
  %v698 = vpack.c.b16 %v687, %v686
  %v699 = vpack.c.b16 %v689, %v688
  %v700 = vpack.c.b16 %v691, %v690
  %v701 = vpack.c.b16 %v693, %v692
  %710 = vmatprep.subr.bf16.mxu0 0
  %711 = vmatpush1.bf16.msra.mxu0 %v694
  %712 = vmatprep.subr.bf16.mxu0 0
  %713 = vmatpush1.bf16.msra.mxu0 %v695
  %714 = vmatprep.subr.bf16.mxu0 0
  %715 = vmatpush1.bf16.msra.mxu0 %v696
  %716 = vmatprep.subr.bf16.mxu0 0
  %717 = vmatpush1.bf16.msra.mxu0 %v697
  %718 = vmatprep.subr.bf16.mxu0 0
  %719 = vmatpush1.bf16.msra.mxu0 %v698
  %720 = vmatprep.subr.bf16.mxu0 0
  %721 = vmatpush1.bf16.msra.mxu0 %v699
  %722 = vmatprep.subr.bf16.mxu0 0
  %723 = vmatpush1.bf16.msra.mxu0 %v700
  %724 = vmatprep.subr.bf16.mxu0 0
  %725 = vmatpush1.bf16.msra.mxu0 %v701
  %726 = vmatprep.subr.bf16.mxu0 0
  %727 = vmatpush1.bf16.msra.mxu0 0
  %728 = vmatprep.subr.bf16.mxu0 0
  %729 = vmatpush1.bf16.msra.mxu0 0
  %730 = vmatprep.subr.bf16.mxu0 0
  %731 = vmatpush1.bf16.msra.mxu0 0
  %732 = vmatprep.subr.bf16.mxu0 0
  %733 = vmatpush1.bf16.msra.mxu0 0
  %734 = vmatprep.subr.bf16.mxu0 0
  %735 = vmatpush1.bf16.msra.mxu0 0
  %736 = vmatprep.subr.bf16.mxu0 0
  %737 = vmatpush1.bf16.msra.mxu0 0
  %738 = vmatprep.subr.bf16.mxu0 0
  %739 = vmatpush1.bf16.msra.mxu0 0
  %740 = vmatprep.subr.bf16.mxu0 0
  %741 = vmatpush1.bf16.msra.mxu0 0
  %742 = vmatprep.mubr.bf16.mxu0 0
  %743 = vmatmul.mubr.bf16.gmra.mrb[0].mxu0 %v645
  %v744 = vpop.f32.mrb[0].mxu0
  %v745 = vadd.f32 0.0, %v744
  %v746 = vpop.f32.mrb[0].mxu0
  %v747 = vpop.f32.mrb[0].mxu0
  %v748 = vpop.f32.mrb[0].mxu0
  %749 = vdwg.mxu0
  %v750 = vadd.f32 %v644, %v745
  %v751 = vtanh.pop %v750
  %752 = vst [vmem:[%s643] sm:$0xff] %v751
  %s753 = scalar_lea.vmem [#allocation3], 40
  %v754 = vld [vmem:[%s753] sm:$0xff]
  %v755 = vpack.c.bf16 %v751, %v751
  %v756 = vld [vmem:[%s3] sm:$0xf]
  %v757 = vld [vmem:[%s3 + $0x4] sm:$0xf]
  %v758 = vld [vmem:[%s3 + $0x8] sm:$0xf]
  %v759 = vld [vmem:[%s3 + $0xc] sm:$0xf]
  %v760 = vld [vmem:[%s3 + $0x10] sm:$0xf]
  %v761 = vld [vmem:[%s3 + $0x14] sm:$0xf]
  %v762 = vld [vmem:[%s3 + $0x18] sm:$0xf]
  %v763 = vld [vmem:[%s3 + $0x1c] sm:$0xf]
  %v764 = vld [vmem:[%s3 + $0x20] sm:$0xf]
  %v765 = vld [vmem:[%s3 + $0x24] sm:$0xf]
  %v766 = vld [vmem:[%s3 + $0x28] sm:$0xf]
  %v767 = vld [vmem:[%s3 + $0x2c] sm:$0xf]
  %v768 = vld [vmem:[%s3 + $0x30] sm:$0xf]
  %v769 = vld [vmem:[%s3 + $0x34] sm:$0xf]
  %v770 = vld [vmem:[%s3 + $0x38] sm:$0xf]
  %v771 = vld [vmem:[%s3 + $0x3c] sm:$0xf]
  %v788 = vunpack.c.l.b16 %v756
  %v789 = vunpack.c.l.b16 %v757
  %v790 = vunpack.c.l.b16 %v758
  %v791 = vunpack.c.l.b16 %v759
  %v792 = vunpack.c.l.b16 %v760
  %v793 = vunpack.c.l.b16 %v761
  %v794 = vunpack.c.l.b16 %v762
  %v795 = vunpack.c.l.b16 %v763
  %v796 = vunpack.c.l.b16 %v764
  %v797 = vunpack.c.l.b16 %v765
  %v798 = vunpack.c.l.b16 %v766
  %v799 = vunpack.c.l.b16 %v767
  %v800 = vunpack.c.l.b16 %v768
  %v801 = vunpack.c.l.b16 %v769
  %v802 = vunpack.c.l.b16 %v770
  %v803 = vunpack.c.l.b16 %v771
  %v804 = vpack.c.b16 %v789, %v788
  %v805 = vpack.c.b16 %v791, %v790
  %v806 = vpack.c.b16 %v793, %v792
  %v807 = vpack.c.b16 %v795, %v794
  %v808 = vpack.c.b16 %v797, %v796
  %v809 = vpack.c.b16 %v799, %v798
  %v810 = vpack.c.b16 %v801, %v800
  %v811 = vpack.c.b16 %v803, %v802
  %820 = vmatprep.subr.bf16.mxu0 0
  %821 = vmatpush1.bf16.msra.mxu0 %v804
  %822 = vmatprep.subr.bf16.mxu0 0
  %823 = vmatpush1.bf16.msra.mxu0 %v805
  %824 = vmatprep.subr.bf16.mxu0 0
  %825 = vmatpush1.bf16.msra.mxu0 %v806
  %826 = vmatprep.subr.bf16.mxu0 0
  %827 = vmatpush1.bf16.msra.mxu0 %v807
  %828 = vmatprep.subr.bf16.mxu0 0
  %829 = vmatpush1.bf16.msra.mxu0 %v808
  %830 = vmatprep.subr.bf16.mxu0 0
  %831 = vmatpush1.bf16.msra.mxu0 %v809
  %832 = vmatprep.subr.bf16.mxu0 0
  %833 = vmatpush1.bf16.msra.mxu0 %v810
  %834 = vmatprep.subr.bf16.mxu0 0
  %835 = vmatpush1.bf16.msra.mxu0 %v811
  %836 = vmatprep.subr.bf16.mxu0 0
  %837 = vmatpush1.bf16.msra.mxu0 0
  %838 = vmatprep.subr.bf16.mxu0 0
  %839 = vmatpush1.bf16.msra.mxu0 0
  %840 = vmatprep.subr.bf16.mxu0 0
  %841 = vmatpush1.bf16.msra.mxu0 0
  %842 = vmatprep.subr.bf16.mxu0 0
  %843 = vmatpush1.bf16.msra.mxu0 0
  %844 = vmatprep.subr.bf16.mxu0 0
  %845 = vmatpush1.bf16.msra.mxu0 0
  %846 = vmatprep.subr.bf16.mxu0 0
  %847 = vmatpush1.bf16.msra.mxu0 0
  %848 = vmatprep.subr.bf16.mxu0 0
  %849 = vmatpush1.bf16.msra.mxu0 0
  %850 = vmatprep.subr.bf16.mxu0 0
  %851 = vmatpush1.bf16.msra.mxu0 0
  %852 = vmatprep.mubr.bf16.mxu0 0
  %853 = vmatmul.mubr.bf16.gmra.mrb[0].mxu0 %v755
  %v854 = vpop.f32.mrb[0].mxu0
  %v855 = vadd.f32 0.0, %v854
  %v856 = vpop.f32.mrb[0].mxu0
  %v857 = vpop.f32.mrb[0].mxu0
  %v858 = vpop.f32.mrb[0].mxu0
  %859 = vdwg.mxu0
  %v860 = vadd.f32 %v754, %v855
  %v861 = vtanh.pop %v860
  %862 = vst [vmem:[%s753] sm:$0xff] %v861
  %s863 = scalar_lea.vmem [#allocation3], 48
  %v864 = vld [vmem:[%s863] sm:$0xff]
  %v865 = vpack.c.bf16 %v861, %v861
  %v866 = vld [vmem:[%s3] sm:$0xf]
  %v867 = vld [vmem:[%s3 + $0x4] sm:$0xf]
  %v868 = vld [vmem:[%s3 + $0x8] sm:$0xf]
  %v869 = vld [vmem:[%s3 + $0xc] sm:$0xf]
  %v870 = vld [vmem:[%s3 + $0x10] sm:$0xf]
  %v871 = vld [vmem:[%s3 + $0x14] sm:$0xf]
  %v872 = vld [vmem:[%s3 + $0x18] sm:$0xf]
  %v873 = vld [vmem:[%s3 + $0x1c] sm:$0xf]
  %v874 = vld [vmem:[%s3 + $0x20] sm:$0xf]
  %v875 = vld [vmem:[%s3 + $0x24] sm:$0xf]
  %v876 = vld [vmem:[%s3 + $0x28] sm:$0xf]
  %v877 = vld [vmem:[%s3 + $0x2c] sm:$0xf]
  %v878 = vld [vmem:[%s3 + $0x30] sm:$0xf]
  %v879 = vld [vmem:[%s3 + $0x34] sm:$0xf]
  %v880 = vld [vmem:[%s3 + $0x38] sm:$0xf]
  %v881 = vld [vmem:[%s3 + $0x3c] sm:$0xf]
  %v898 = vunpack.c.l.b16 %v866
  %v899 = vunpack.c.l.b16 %v867
  %v900 = vunpack.c.l.b16 %v868
  %v901 = vunpack.c.l.b16 %v869
  %v902 = vunpack.c.l.b16 %v870
  %v903 = vunpack.c.l.b16 %v871
  %v904 = vunpack.c.l.b16 %v872
  %v905 = vunpack.c.l.b16 %v873
  %v906 = vunpack.c.l.b16 %v874
  %v907 = vunpack.c.l.b16 %v875
  %v908 = vunpack.c.l.b16 %v876
  %v909 = vunpack.c.l.b16 %v877
  %v910 = vunpack.c.l.b16 %v878
  %v911 = vunpack.c.l.b16 %v879
  %v912 = vunpack.c.l.b16 %v880
  %v913 = vunpack.c.l.b16 %v881
  %v914 = vpack.c.b16 %v899, %v898
  %v915 = vpack.c.b16 %v901, %v900
  %v916 = vpack.c.b16 %v903, %v902
  %v917 = vpack.c.b16 %v905, %v904
  %v918 = vpack.c.b16 %v907, %v906
  %v919 = vpack.c.b16 %v909, %v908
  %v920 = vpack.c.b16 %v911, %v910
  %v921 = vpack.c.b16 %v913, %v912
  %930 = vmatprep.subr.bf16.mxu0 0
  %931 = vmatpush1.bf16.msra.mxu0 %v914
  %932 = vmatprep.subr.bf16.mxu0 0
  %933 = vmatpush1.bf16.msra.mxu0 %v915
  %934 = vmatprep.subr.bf16.mxu0 0
  %935 = vmatpush1.bf16.msra.mxu0 %v916
  %936 = vmatprep.subr.bf16.mxu0 0
  %937 = vmatpush1.bf16.msra.mxu0 %v917
  %938 = vmatprep.subr.bf16.mxu0 0
  %939 = vmatpush1.bf16.msra.mxu0 %v918
  %940 = vmatprep.subr.bf16.mxu0 0
  %941 = vmatpush1.bf16.msra.mxu0 %v919
  %942 = vmatprep.subr.bf16.mxu0 0
  %943 = vmatpush1.bf16.msra.mxu0 %v920
  %944 = vmatprep.subr.bf16.mxu0 0
  %945 = vmatpush1.bf16.msra.mxu0 %v921
  %946 = vmatprep.subr.bf16.mxu0 0
  %947 = vmatpush1.bf16.msra.mxu0 0
  %948 = vmatprep.subr.bf16.mxu0 0
  %949 = vmatpush1.bf16.msra.mxu0 0
  %950 = vmatprep.subr.bf16.mxu0 0
  %951 = vmatpush1.bf16.msra.mxu0 0
  %952 = vmatprep.subr.bf16.mxu0 0
  %953 = vmatpush1.bf16.msra.mxu0 0
  %954 = vmatprep.subr.bf16.mxu0 0
  %955 = vmatpush1.bf16.msra.mxu0 0
  %956 = vmatprep.subr.bf16.mxu0 0
  %957 = vmatpush1.bf16.msra.mxu0 0
  %958 = vmatprep.subr.bf16.mxu0 0
  %959 = vmatpush1.bf16.msra.mxu0 0
  %960 = vmatprep.subr.bf16.mxu0 0
  %961 = vmatpush1.bf16.msra.mxu0 0
  %962 = vmatprep.mubr.bf16.mxu0 0
  %963 = vmatmul.mubr.bf16.gmra.mrb[0].mxu0 %v865
  %v964 = vpop.f32.mrb[0].mxu0
  %v965 = vadd.f32 0.0, %v964
  %v966 = vpop.f32.mrb[0].mxu0
  %v967 = vpop.f32.mrb[0].mxu0
  %v968 = vpop.f32.mrb[0].mxu0
  %969 = vdwg.mxu0
  %v970 = vadd.f32 %v864, %v965
  %v971 = vtanh.pop %v970
  %972 = vst [vmem:[%s863] sm:$0xff] %v971
  %s973 = scalar_lea.vmem [#allocation3], 56
  %v974 = vld [vmem:[%s973] sm:$0xff]
  %v975 = vpack.c.bf16 %v971, %v971
  %v976 = vld [vmem:[%s3] sm:$0xf]
  %v977 = vld [vmem:[%s3 + $0x4] sm:$0xf]
  %v978 = vld [vmem:[%s3 + $0x8] sm:$0xf]
  %v979 = vld [vmem:[%s3 + $0xc] sm:$0xf]
  %v980 = vld [vmem:[%s3 + $0x10] sm:$0xf]
  %v981 = vld [vmem:[%s3 + $0x14] sm:$0xf]
  %v982 = vld [vmem:[%s3 + $0x18] sm:$0xf]
  %v983 = vld [vmem:[%s3 + $0x1c] sm:$0xf]
  %v984 = vld [vmem:[%s3 + $0x20] sm:$0xf]
  %v985 = vld [vmem:[%s3 + $0x24] sm:$0xf]
  %v986 = vld [vmem:[%s3 + $0x28] sm:$0xf]
  %v987 = vld [vmem:[%s3 + $0x2c] sm:$0xf]
  %v988 = vld [vmem:[%s3 + $0x30] sm:$0xf]
  %v989 = vld [vmem:[%s3 + $0x34] sm:$0xf]
  %v990 = vld [vmem:[%s3 + $0x38] sm:$0xf]
  %v991 = vld [vmem:[%s3 + $0x3c] sm:$0xf]
  %v1008 = vunpack.c.l.b16 %v976
  %v1009 = vunpack.c.l.b16 %v977
  %v1010 = vunpack.c.l.b16 %v978
  %v1011 = vunpack.c.l.b16 %v979
  %v1012 = vunpack.c.l.b16 %v980
  %v1013 = vunpack.c.l.b16 %v981
  %v1014 = vunpack.c.l.b16 %v982
  %v1015 = vunpack.c.l.b16 %v983
  %v1016 = vunpack.c.l.b16 %v984
  %v1017 = vunpack.c.l.b16 %v985
  %v1018 = vunpack.c.l.b16 %v986
  %v1019 = vunpack.c.l.b16 %v987
  %v1020 = vunpack.c.l.b16 %v988
  %v1021 = vunpack.c.l.b16 %v989
  %v1022 = vunpack.c.l.b16 %v990
  %v1023 = vunpack.c.l.b16 %v991
  %v1024 = vpack.c.b16 %v1009, %v1008
  %v1025 = vpack.c.b16 %v1011, %v1010
  %v1026 = vpack.c.b16 %v1013, %v1012
  %v1027 = vpack.c.b16 %v1015, %v1014
  %v1028 = vpack.c.b16 %v1017, %v1016
  %v1029 = vpack.c.b16 %v1019, %v1018
  %v1030 = vpack.c.b16 %v1021, %v1020
  %v1031 = vpack.c.b16 %v1023, %v1022
  %1040 = vmatprep.subr.bf16.mxu0 0
  %1041 = vmatpush1.bf16.msra.mxu0 %v1024
  %1042 = vmatprep.subr.bf16.mxu0 0
  %1043 = vmatpush1.bf16.msra.mxu0 %v1025
  %1044 = vmatprep.subr.bf16.mxu0 0
  %1045 = vmatpush1.bf16.msra.mxu0 %v1026
  %1046 = vmatprep.subr.bf16.mxu0 0
  %1047 = vmatpush1.bf16.msra.mxu0 %v1027
  %1048 = vmatprep.subr.bf16.mxu0 0
  %1049 = vmatpush1.bf16.msra.mxu0 %v1028
  %1050 = vmatprep.subr.bf16.mxu0 0
  %1051 = vmatpush1.bf16.msra.mxu0 %v1029
  %1052 = vmatprep.subr.bf16.mxu0 0
  %1053 = vmatpush1.bf16.msra.mxu0 %v1030
  %1054 = vmatprep.subr.bf16.mxu0 0
  %1055 = vmatpush1.bf16.msra.mxu0 %v1031
  %1056 = vmatprep.subr.bf16.mxu0 0
  %1057 = vmatpush1.bf16.msra.mxu0 0
  %1058 = vmatprep.subr.bf16.mxu0 0
  %1059 = vmatpush1.bf16.msra.mxu0 0
  %1060 = vmatprep.subr.bf16.mxu0 0
  %1061 = vmatpush1.bf16.msra.mxu0 0
  %1062 = vmatprep.subr.bf16.mxu0 0
  %1063 = vmatpush1.bf16.msra.mxu0 0
  %1064 = vmatprep.subr.bf16.mxu0 0
  %1065 = vmatpush1.bf16.msra.mxu0 0
  %1066 = vmatprep.subr.bf16.mxu0 0
  %1067 = vmatpush1.bf16.msra.mxu0 0
  %1068 = vmatprep.subr.bf16.mxu0 0
  %1069 = vmatpush1.bf16.msra.mxu0 0
  %1070 = vmatprep.subr.bf16.mxu0 0
  %1071 = vmatpush1.bf16.msra.mxu0 0
  %1072 = vmatprep.mubr.bf16.mxu0 0
  %1073 = vmatmul.mubr.bf16.gmra.mrb[0].mxu0 %v975
  %v1074 = vpop.f32.mrb[0].mxu0
  %v1075 = vadd.f32 0.0, %v1074
  %v1076 = vpop.f32.mrb[0].mxu0
  %v1077 = vpop.f32.mrb[0].mxu0
  %v1078 = vpop.f32.mrb[0].mxu0
  %1079 = vdwg.mxu0
  %v1080 = vadd.f32 %v974, %v1075
  %v1081 = vtanh.pop %v1080
  %1082 = vst [vmem:[%s973] sm:$0xff] %v1081
  %1083 = vst [vmem:[#allocation2] sm:$0xff] %v1081
  %v1084 = vld [vmem:[#allocation3] sm:$0xff]
  %v1085 = vld [vmem:[#allocation3 + $0x8] sm:$0xff]
  %v1086 = vld [vmem:[#allocation3 + $0x10] sm:$0xff]
  %v1087 = vld [vmem:[#allocation3 + $0x18] sm:$0xff]
  %v1088 = vld [vmem:[#allocation3 + $0x20] sm:$0xff]
  %v1089 = vld [vmem:[#allocation3 + $0x28] sm:$0xff]
  %v1090 = vld [vmem:[#allocation3 + $0x30] sm:$0xff]
  %v1091 = vld [vmem:[#allocation3 + $0x38] sm:$0xff]
  %v1092 = vpack.c.bf16 %v1085, %v1084
  %v1093 = vpack.c.bf16 %v1087, %v1086
  %v1094 = vpack.c.bf16 %v1089, %v1088
  %v1095 = vpack.c.bf16 %v1091, %v1090
  %v1100 = vunpack.c.l.b16 %v1092
  %v1101 = vunpack.c.h.b16 %v1092
  %v1102 = vunpack.c.l.b16 %v1093
  %v1103 = vunpack.c.h.b16 %v1093
  %v1104 = vunpack.c.l.b16 %v1094
  %v1105 = vunpack.c.h.b16 %v1094
  %v1106 = vunpack.c.l.b16 %v1095
  %v1107 = vunpack.c.h.b16 %v1095
  %v1108 = vpack.c.b16 %v1100, %v1100
  %v1109 = vpack.c.b16 %v1101, %v1101
  %v1110 = vpack.c.b16 %v1102, %v1102
  %v1111 = vpack.c.b16 %v1103, %v1103
  %v1112 = vpack.c.b16 %v1104, %v1104
  %v1113 = vpack.c.b16 %v1105, %v1105
  %v1114 = vpack.c.b16 %v1106, %v1106
  %v1115 = vpack.c.b16 %v1107, %v1107
  %1124 = vst [vmem:[%s5] sm:$0xf] %v1108
  %1125 = vst [vmem:[%s5 + $0x4] sm:$0xf] %v1109
  %1126 = vst [vmem:[%s5 + $0x8] sm:$0xf] %v1110
  %1127 = vst [vmem:[%s5 + $0xc] sm:$0xf] %v1111
  %1128 = vst [vmem:[%s5 + $0x10] sm:$0xf] %v1112
  %1129 = vst [vmem:[%s5 + $0x14] sm:$0xf] %v1113
  %1130 = vst [vmem:[%s5 + $0x18] sm:$0xf] %v1114
  %1131 = vst [vmem:[%s5 + $0x1c] sm:$0xf] %v1115
  // Predicated region
  $region26: #{rnn_model_forward.3} parent=0 // pred_check
    _
  $region27: #{rnn_model_forward.3} parent=0 // pred_check_branch
    %1133 = sbr.rel (0) target = $region29
  $region28: #{rnn_model_forward.3} parent=0 // pred_region
    _
  $region29: #{rnn_model_forward.3} parent=0 // pred_fallthru
    _
  // Predicated region
  $region30: #{rnn_model_forward.3} parent=0 // pred_check
    _
  $region31: #{rnn_model_forward.3} parent=0 // pred_check_branch
    %1135 = sbr.rel (0) target = $region33
  $region32: #{rnn_model_forward.3} parent=0 // pred_region
    _
  $region33: #{rnn_model_forward.3} parent=0 // pred_fallthru
    _

// kernel: rnn_model_forward.2
$region0: #{rnn_model_forward.2}
  #allocation0 [shape = 'u32[]', space=smem, size = 0x4, offset = 0x4, fixed_abs, tag = 'smem constant byte address 0x4 - core index']
  #allocation1 [shape = 'u32[144,128]{1,0:T(1,128)}', space=vmem, size = 0x12000, scoped, tag = 'internal scratch']
  #allocation2 [shape = 'f32[8,128]{1,0:T(8,128)}', space=vmem, size = 0x1000, scoped, tag = 'scratch operand']
  #allocation3 [shape = 'f32[64,128]{1,0:T(8,128)}', space=vmem, size = 0x8000, scoped, tag = 'scratch operand']
  %s0 = inlined_call_operand.vmem [shape: bf16[64,128], index: 0, kind: input, shape index: {}]
  %s1 = inlined_call_operand.vmem [shape: f32[8,128], index: 1, kind: input, shape index: {}]
  %s2 = inlined_call_operand.vmem [shape: bf16[128,128], index: 2, kind: input, shape index: {}]
  %s3 = inlined_call_operand.hbm [shape: bf16[128,128], index: 3, kind: input, shape index: {}]
  %s4 = inlined_call_operand.vmem [shape: f32[1,128], index: 4, kind: input, shape index: {}]
  %s5 = inlined_call_operand.vmem [shape: bf16[64,128], index: 5, kind: output, shape index: {}]
  %s6 = sld [smem:[#allocation0]]
  $region38: #{rnn_model_forward.2} parent=0
    _
  %s8 = ssub.s32 1, %s6
  %s9 = scalar_select 0, %s8, %s6
  $region1: #{rnn_model_forward.2} parent=0
    #allocation4 [shape = 'u8[32768]{0}', space=vmem, size = 0x8000, scoped, tag = 'input window, operand 3, single buffered']
    #allocation5 [shape = 's32[1]{0}', space=sflag, size = 0x4, scoped, tag = 'scoped memory for rnn_model_forward.2']
    %10 = vsyncpa [#allocation5], 0
    // Predicated region
    $region2: #{rnn_model_forward.2} parent=1 // pred_check
      _
    $region3: #{rnn_model_forward.2} parent=1 // pred_check_branch
      %12 = sbr.rel (0) target = $region5
    $region4: #{rnn_model_forward.2} parent=1 // pred_region
      _
    $region5: #{rnn_model_forward.2} parent=1 // pred_fallthru
      _
    // Predicated region
    $region6: #{rnn_model_forward.2} parent=1 // pred_check
      _
    $region7: #{rnn_model_forward.2} parent=1 // pred_check_branch
      %14 = sbr.rel (0) target = $region9
    $region8: #{rnn_model_forward.2} parent=1 // pred_region
      _
    $region9: #{rnn_model_forward.2} parent=1 // pred_fallthru
      _
    // Predicated region
    $region10: #{rnn_model_forward.2} parent=1 // pred_check
      _
    $region11: #{rnn_model_forward.2} parent=1 // pred_check_branch
      %16 = sbr.rel (0) target = $region13
    $region12: #{rnn_model_forward.2} parent=1 // pred_region
      _
    $region13: #{rnn_model_forward.2} parent=1 // pred_fallthru
      _
    // Predicated region
    $region14: #{rnn_model_forward.2} parent=1 // pred_check
      _
    $region15: #{rnn_model_forward.2} parent=1 // pred_check_branch
      %18 = sbr.rel (0) target = $region17
    $region16: #{rnn_model_forward.2} parent=1 // pred_region
      %s20 = ssub.s32 1024, 1024
      %21 = vsyncadd [#allocation5], %s20
      %s22 = sshll.u32 [#allocation4], 4
      %s23 = int_to_ptr.vmem [resolvable:$true] %s22
      %28 = dma.hbm_to_vmem [thread:$0]  %s3, 1024, %s23, [#allocation5], 64, 64, 4
    $region17: #{rnn_model_forward.2} parent=1 // pred_fallthru
      _
    // Predicated region
    $region18: #{rnn_model_forward.2} parent=1 // pred_check
      _
    $region19: #{rnn_model_forward.2} parent=1 // pred_check_branch
      %30 = sbr.rel (0) target = $region21
    $region20: #{rnn_model_forward.2} parent=1 // pred_region
      _
    $region21: #{rnn_model_forward.2} parent=1 // pred_fallthru
      _
    // Predicated region
    $region22: #{rnn_model_forward.2} parent=1 // pred_check
      _
    $region23: #{rnn_model_forward.2} parent=1 // pred_check_branch
      %32 = sbr.rel (0) target = $region25
    $region24: #{rnn_model_forward.2} parent=1 // pred_region
      %33 = dma.done [#allocation5], 1024
    $region25: #{rnn_model_forward.2} parent=1 // pred_fallthru
      _
    %p35 = scmp.eq.s32.totalorder 0, 0
    // Predicated region
    $region26: #{rnn_model_forward.2} parent=1 // pred_check
      %p36 = pneg %p35
    $region27: #{rnn_model_forward.2} parent=1 // pred_check_branch
      %38 = sbr.rel (%p36) target = $region29
    $region28: #{rnn_model_forward.2} parent=1 // pred_region
      %v39 = vld [vmem:[%s1] sm:$0xff]
      %40 = vst [vmem:[#allocation2] sm:$0xff] %v39
    $region29: #{rnn_model_forward.2} parent=1 // pred_fallthru
      _
    %v41 = vld [vmem:[%s0] sm:$0xf]
    %v42 = vld [vmem:[%s0 + $0x4] sm:$0xf]
    %v43 = vld [vmem:[%s0 + $0x8] sm:$0xf]
    %v44 = vld [vmem:[%s0 + $0xc] sm:$0xf]
    %v45 = vld [vmem:[%s0 + $0x10] sm:$0xf]
    %v46 = vld [vmem:[%s0 + $0x14] sm:$0xf]
    %v47 = vld [vmem:[%s0 + $0x18] sm:$0xf]
    %v48 = vld [vmem:[%s0 + $0x1c] sm:$0xf]
    %v49 = vld [vmem:[%s2] sm:$0xf]
    %v50 = vld [vmem:[%s2 + $0x4] sm:$0xf]
    %v51 = vld [vmem:[%s2 + $0x8] sm:$0xf]
    %v52 = vld [vmem:[%s2 + $0xc] sm:$0xf]
    %v53 = vld [vmem:[%s2 + $0x10] sm:$0xf]
    %v54 = vld [vmem:[%s2 + $0x14] sm:$0xf]
    %v55 = vld [vmem:[%s2 + $0x18] sm:$0xf]
    %v56 = vld [vmem:[%s2 + $0x1c] sm:$0xf]
    %v57 = vld [vmem:[%s2 + $0x20] sm:$0xf]
    %v58 = vld [vmem:[%s2 + $0x24] sm:$0xf]
    %v59 = vld [vmem:[%s2 + $0x28] sm:$0xf]
    %v60 = vld [vmem:[%s2 + $0x2c] sm:$0xf]
    %v61 = vld [vmem:[%s2 + $0x30] sm:$0xf]
    %v62 = vld [vmem:[%s2 + $0x34] sm:$0xf]
    %v63 = vld [vmem:[%s2 + $0x38] sm:$0xf]
    %v64 = vld [vmem:[%s2 + $0x3c] sm:$0xf]
    %v65 = vld [vmem:[%s4] sm:$0x1]
    %v67 = vlaneseq
    %v68 = vshrl.u32 %v67, 7
    %v69 = vsub.s32 0, %v68
    %v70 = vrot.slane %v65, %v69
    %v80 = vunpack.c.l.b16 %v41
    %v81 = vunpack.c.l.b16 %v42
    %v82 = vunpack.c.l.b16 %v43
    %v83 = vunpack.c.l.b16 %v44
    %v84 = vunpack.c.l.b16 %v45
    %v85 = vunpack.c.l.b16 %v46
    %v86 = vunpack.c.l.b16 %v47
    %v87 = vunpack.c.l.b16 %v48
    %v88 = vpack.c.b16 %v81, %v80
    %v89 = vpack.c.b16 %v83, %v82
    %v90 = vpack.c.b16 %v85, %v84
    %v91 = vpack.c.b16 %v87, %v86
    %v112 = vunpack.c.l.b16 %v49
    %v113 = vunpack.c.l.b16 %v50
    %v114 = vunpack.c.l.b16 %v51
    %v115 = vunpack.c.l.b16 %v52
    %v116 = vunpack.c.l.b16 %v53
    %v117 = vunpack.c.l.b16 %v54
    %v118 = vunpack.c.l.b16 %v55
    %v119 = vunpack.c.l.b16 %v56
    %v120 = vunpack.c.l.b16 %v57
    %v121 = vunpack.c.l.b16 %v58
    %v122 = vunpack.c.l.b16 %v59
    %v123 = vunpack.c.l.b16 %v60
    %v124 = vunpack.c.l.b16 %v61
    %v125 = vunpack.c.l.b16 %v62
    %v126 = vunpack.c.l.b16 %v63
    %v127 = vunpack.c.l.b16 %v64
    %v128 = vpack.c.b16 %v113, %v112
    %v129 = vpack.c.b16 %v115, %v114
    %v130 = vpack.c.b16 %v117, %v116
    %v131 = vpack.c.b16 %v119, %v118
    %v132 = vpack.c.b16 %v121, %v120
    %v133 = vpack.c.b16 %v123, %v122
    %v134 = vpack.c.b16 %v125, %v124
    %v135 = vpack.c.b16 %v127, %v126
    %144 = vmatprep.subr.bf16.mxu0 0
    %145 = vmatpush1.bf16.msra.mxu0 %v128
    %146 = vmatprep.subr.bf16.mxu0 0
    %147 = vmatpush1.bf16.msra.mxu0 %v129
    %148 = vmatprep.subr.bf16.mxu0 0
    %149 = vmatpush1.bf16.msra.mxu0 %v130
    %150 = vmatprep.subr.bf16.mxu0 0
    %151 = vmatpush1.bf16.msra.mxu0 %v131
    %152 = vmatprep.subr.bf16.mxu0 0
    %153 = vmatpush1.bf16.msra.mxu0 %v132
    %154 = vmatprep.subr.bf16.mxu0 0
    %155 = vmatpush1.bf16.msra.mxu0 %v133
    %156 = vmatprep.subr.bf16.mxu0 0
    %157 = vmatpush1.bf16.msra.mxu0 %v134
    %158 = vmatprep.subr.bf16.mxu0 0
    %159 = vmatpush1.bf16.msra.mxu0 %v135
    %160 = vmatprep.subr.bf16.mxu0 0
    %161 = vmatpush1.bf16.msra.mxu0 0
    %162 = vmatprep.subr.bf16.mxu0 0
    %163 = vmatpush1.bf16.msra.mxu0 0
    %164 = vmatprep.subr.bf16.mxu0 0
    %165 = vmatpush1.bf16.msra.mxu0 0
    %166 = vmatprep.subr.bf16.mxu0 0
    %167 = vmatpush1.bf16.msra.mxu0 0
    %168 = vmatprep.subr.bf16.mxu0 0
    %169 = vmatpush1.bf16.msra.mxu0 0
    %170 = vmatprep.subr.bf16.mxu0 0
    %171 = vmatpush1.bf16.msra.mxu0 0
    %172 = vmatprep.subr.bf16.mxu0 0
    %173 = vmatpush1.bf16.msra.mxu0 0
    %174 = vmatprep.subr.bf16.mxu0 0
    %175 = vmatpush1.bf16.msra.mxu0 0
    %176 = vmatprep.mubr.bf16.mxu0 0
    %177 = vmatmul.mubr.bf16.gmra.mrb[0].mxu0 %v88
    %v178 = vpop.f32.mrb[0].mxu0
    %v179 = vadd.f32 %v70, %v178
    %v180 = vpop.f32.mrb[0].mxu0
    %v181 = vpop.f32.mrb[0].mxu0
    %v182 = vadd.f32 %v70, %v181
    %v183 = vpop.f32.mrb[0].mxu0
    %184 = vmatprep.mubr.bf16.mxu0 0
    %185 = vmatmul.mubr.bf16.gmra.mrb[0].mxu0 %v89
    %v186 = vpop.f32.mrb[0].mxu0
    %v187 = vadd.f32 %v70, %v186
    %v188 = vpop.f32.mrb[0].mxu0
    %v189 = vpop.f32.mrb[0].mxu0
    %v190 = vadd.f32 %v70, %v189
    %v191 = vpop.f32.mrb[0].mxu0
    %192 = vmatprep.mubr.bf16.mxu0 0
    %193 = vmatmul.mubr.bf16.gmra.mrb[0].mxu0 %v90
    %v194 = vpop.f32.mrb[0].mxu0
    %v195 = vadd.f32 %v70, %v194
    %v196 = vpop.f32.mrb[0].mxu0
    %v197 = vpop.f32.mrb[0].mxu0
    %v198 = vadd.f32 %v70, %v197
    %v199 = vpop.f32.mrb[0].mxu0
    %200 = vmatprep.mubr.bf16.mxu0 0
    %201 = vmatmul.mubr.bf16.gmra.mrb[0].mxu0 %v91
    %v202 = vpop.f32.mrb[0].mxu0
    %v203 = vadd.f32 %v70, %v202
    %v204 = vpop.f32.mrb[0].mxu0
    %v205 = vpop.f32.mrb[0].mxu0
    %v206 = vadd.f32 %v70, %v205
    %v207 = vpop.f32.mrb[0].mxu0
    %208 = vdwg.mxu0
    %209 = vst [vmem:[#allocation3] sm:$0xff] %v179
    %210 = vst [vmem:[#allocation3 + $0x8] sm:$0xff] %v182
    %211 = vst [vmem:[#allocation3 + $0x10] sm:$0xff] %v187
    %212 = vst [vmem:[#allocation3 + $0x18] sm:$0xff] %v190
    %213 = vst [vmem:[#allocation3 + $0x20] sm:$0xff] %v195
    %214 = vst [vmem:[#allocation3 + $0x28] sm:$0xff] %v198
    %215 = vst [vmem:[#allocation3 + $0x30] sm:$0xff] %v203
    %216 = vst [vmem:[#allocation3 + $0x38] sm:$0xff] %v206
    %v217 = vld [vmem:[#allocation2] sm:$0xff]
    %v218 = vld [vmem:[#allocation3] sm:$0xff]
    %v219 = vpack.c.bf16 %v217, %v217
    %v220 = vld [vmem:[#allocation4] sm:$0xf]
    %v221 = vld [vmem:[#allocation4 + $0x4] sm:$0xf]
    %v222 = vld [vmem:[#allocation4 + $0x8] sm:$0xf]
    %v223 = vld [vmem:[#allocation4 + $0xc] sm:$0xf]
    %v224 = vld [vmem:[#allocation4 + $0x10] sm:$0xf]
    %v225 = vld [vmem:[#allocation4 + $0x14] sm:$0xf]
    %v226 = vld [vmem:[#allocation4 + $0x18] sm:$0xf]
    %v227 = vld [vmem:[#allocation4 + $0x1c] sm:$0xf]
    %v228 = vld [vmem:[#allocation4 + $0x20] sm:$0xf]
    %v229 = vld [vmem:[#allocation4 + $0x24] sm:$0xf]
    %v230 = vld [vmem:[#allocation4 + $0x28] sm:$0xf]
    %v231 = vld [vmem:[#allocation4 + $0x2c] sm:$0xf]
    %v232 = vld [vmem:[#allocation4 + $0x30] sm:$0xf]
    %v233 = vld [vmem:[#allocation4 + $0x34] sm:$0xf]
    %v234 = vld [vmem:[#allocation4 + $0x38] sm:$0xf]
    %v235 = vld [vmem:[#allocation4 + $0x3c] sm:$0xf]
    %v252 = vunpack.c.l.b16 %v220
    %v253 = vunpack.c.l.b16 %v221
    %v254 = vunpack.c.l.b16 %v222
    %v255 = vunpack.c.l.b16 %v223
    %v256 = vunpack.c.l.b16 %v224
    %v257 = vunpack.c.l.b16 %v225
    %v258 = vunpack.c.l.b16 %v226
    %v259 = vunpack.c.l.b16 %v227
    %v260 = vunpack.c.l.b16 %v228
    %v261 = vunpack.c.l.b16 %v229
    %v262 = vunpack.c.l.b16 %v230
    %v263 = vunpack.c.l.b16 %v231
    %v264 = vunpack.c.l.b16 %v232
    %v265 = vunpack.c.l.b16 %v233
    %v266 = vunpack.c.l.b16 %v234
    %v267 = vunpack.c.l.b16 %v235
    %v268 = vpack.c.b16 %v253, %v252
    %v269 = vpack.c.b16 %v255, %v254
    %v270 = vpack.c.b16 %v257, %v256
    %v271 = vpack.c.b16 %v259, %v258
    %v272 = vpack.c.b16 %v261, %v260
    %v273 = vpack.c.b16 %v263, %v262
    %v274 = vpack.c.b16 %v265, %v264
    %v275 = vpack.c.b16 %v267, %v266
    %284 = vmatprep.subr.bf16.mxu0 0
    %285 = vmatpush1.bf16.msra.mxu0 %v268
    %286 = vmatprep.subr.bf16.mxu0 0
    %287 = vmatpush1.bf16.msra.mxu0 %v269
    %288 = vmatprep.subr.bf16.mxu0 0
    %289 = vmatpush1.bf16.msra.mxu0 %v270
    %290 = vmatprep.subr.bf16.mxu0 0
    %291 = vmatpush1.bf16.msra.mxu0 %v271
    %292 = vmatprep.subr.bf16.mxu0 0
    %293 = vmatpush1.bf16.msra.mxu0 %v272
    %294 = vmatprep.subr.bf16.mxu0 0
    %295 = vmatpush1.bf16.msra.mxu0 %v273
    %296 = vmatprep.subr.bf16.mxu0 0
    %297 = vmatpush1.bf16.msra.mxu0 %v274
    %298 = vmatprep.subr.bf16.mxu0 0
    %299 = vmatpush1.bf16.msra.mxu0 %v275
    %300 = vmatprep.subr.bf16.mxu0 0
    %301 = vmatpush1.bf16.msra.mxu0 0
    %302 = vmatprep.subr.bf16.mxu0 0
    %303 = vmatpush1.bf16.msra.mxu0 0
    %304 = vmatprep.subr.bf16.mxu0 0
    %305 = vmatpush1.bf16.msra.mxu0 0
    %306 = vmatprep.subr.bf16.mxu0 0
    %307 = vmatpush1.bf16.msra.mxu0 0
    %308 = vmatprep.subr.bf16.mxu0 0
    %309 = vmatpush1.bf16.msra.mxu0 0
    %310 = vmatprep.subr.bf16.mxu0 0
    %311 = vmatpush1.bf16.msra.mxu0 0
    %312 = vmatprep.subr.bf16.mxu0 0
    %313 = vmatpush1.bf16.msra.mxu0 0
    %314 = vmatprep.subr.bf16.mxu0 0
    %315 = vmatpush1.bf16.msra.mxu0 0
    %316 = vmatprep.mubr.bf16.mxu0 0
    %317 = vmatmul.mubr.bf16.gmra.mrb[0].mxu0 %v219
    %v318 = vpop.f32.mrb[0].mxu0
    %v319 = vadd.f32 0.0, %v318
    %v320 = vpop.f32.mrb[0].mxu0
    %v321 = vpop.f32.mrb[0].mxu0
    %v322 = vpop.f32.mrb[0].mxu0
    %323 = vdwg.mxu0
    %v324 = vadd.f32 %v218, %v319
    %v325 = vtanh.pop %v324
    %326 = vst [vmem:[#allocation3] sm:$0xff] %v325
    %s327 = scalar_lea.vmem [#allocation3], 8
    %v328 = vld [vmem:[%s327] sm:$0xff]
    %v329 = vpack.c.bf16 %v325, %v325
    %v330 = vld [vmem:[#allocation4] sm:$0xf]
    %v331 = vld [vmem:[#allocation4 + $0x4] sm:$0xf]
    %v332 = vld [vmem:[#allocation4 + $0x8] sm:$0xf]
    %v333 = vld [vmem:[#allocation4 + $0xc] sm:$0xf]
    %v334 = vld [vmem:[#allocation4 + $0x10] sm:$0xf]
    %v335 = vld [vmem:[#allocation4 + $0x14] sm:$0xf]
    %v336 = vld [vmem:[#allocation4 + $0x18] sm:$0xf]
    %v337 = vld [vmem:[#allocation4 + $0x1c] sm:$0xf]
    %v338 = vld [vmem:[#allocation4 + $0x20] sm:$0xf]
    %v339 = vld [vmem:[#allocation4 + $0x24] sm:$0xf]
    %v340 = vld [vmem:[#allocation4 + $0x28] sm:$0xf]
    %v341 = vld [vmem:[#allocation4 + $0x2c] sm:$0xf]
    %v342 = vld [vmem:[#allocation4 + $0x30] sm:$0xf]
    %v343 = vld [vmem:[#allocation4 + $0x34] sm:$0xf]
    %v344 = vld [vmem:[#allocation4 + $0x38] sm:$0xf]
    %v345 = vld [vmem:[#allocation4 + $0x3c] sm:$0xf]
    %v362 = vunpack.c.l.b16 %v330
    %v363 = vunpack.c.l.b16 %v331
    %v364 = vunpack.c.l.b16 %v332
    %v365 = vunpack.c.l.b16 %v333
    %v366 = vunpack.c.l.b16 %v334
    %v367 = vunpack.c.l.b16 %v335
    %v368 = vunpack.c.l.b16 %v336
    %v369 = vunpack.c.l.b16 %v337
    %v370 = vunpack.c.l.b16 %v338
    %v371 = vunpack.c.l.b16 %v339
    %v372 = vunpack.c.l.b16 %v340
    %v373 = vunpack.c.l.b16 %v341
    %v374 = vunpack.c.l.b16 %v342
    %v375 = vunpack.c.l.b16 %v343
    %v376 = vunpack.c.l.b16 %v344
    %v377 = vunpack.c.l.b16 %v345
    %v378 = vpack.c.b16 %v363, %v362
    %v379 = vpack.c.b16 %v365, %v364
    %v380 = vpack.c.b16 %v367, %v366
    %v381 = vpack.c.b16 %v369, %v368
    %v382 = vpack.c.b16 %v371, %v370
    %v383 = vpack.c.b16 %v373, %v372
    %v384 = vpack.c.b16 %v375, %v374
    %v385 = vpack.c.b16 %v377, %v376
    %394 = vmatprep.subr.bf16.mxu0 0
    %395 = vmatpush1.bf16.msra.mxu0 %v378
    %396 = vmatprep.subr.bf16.mxu0 0
    %397 = vmatpush1.bf16.msra.mxu0 %v379
    %398 = vmatprep.subr.bf16.mxu0 0
    %399 = vmatpush1.bf16.msra.mxu0 %v380
    %400 = vmatprep.subr.bf16.mxu0 0
    %401 = vmatpush1.bf16.msra.mxu0 %v381
    %402 = vmatprep.subr.bf16.mxu0 0
    %403 = vmatpush1.bf16.msra.mxu0 %v382
    %404 = vmatprep.subr.bf16.mxu0 0
    %405 = vmatpush1.bf16.msra.mxu0 %v383
    %406 = vmatprep.subr.bf16.mxu0 0
    %407 = vmatpush1.bf16.msra.mxu0 %v384
    %408 = vmatprep.subr.bf16.mxu0 0
    %409 = vmatpush1.bf16.msra.mxu0 %v385
    %410 = vmatprep.subr.bf16.mxu0 0
    %411 = vmatpush1.bf16.msra.mxu0 0
    %412 = vmatprep.subr.bf16.mxu0 0
    %413 = vmatpush1.bf16.msra.mxu0 0
    %414 = vmatprep.subr.bf16.mxu0 0
    %415 = vmatpush1.bf16.msra.mxu0 0
    %416 = vmatprep.subr.bf16.mxu0 0
    %417 = vmatpush1.bf16.msra.mxu0 0
    %418 = vmatprep.subr.bf16.mxu0 0
    %419 = vmatpush1.bf16.msra.mxu0 0
    %420 = vmatprep.subr.bf16.mxu0 0
    %421 = vmatpush1.bf16.msra.mxu0 0
    %422 = vmatprep.subr.bf16.mxu0 0
    %423 = vmatpush1.bf16.msra.mxu0 0
    %424 = vmatprep.subr.bf16.mxu0 0
    %425 = vmatpush1.bf16.msra.mxu0 0
    %426 = vmatprep.mubr.bf16.mxu0 0
    %427 = vmatmul.mubr.bf16.gmra.mrb[0].mxu0 %v329
    %v428 = vpop.f32.mrb[0].mxu0
    %v429 = vadd.f32 0.0, %v428
    %v430 = vpop.f32.mrb[0].mxu0
    %v431 = vpop.f32.mrb[0].mxu0
    %v432 = vpop.f32.mrb[0].mxu0
    %433 = vdwg.mxu0
    %v434 = vadd.f32 %v328, %v429
    %v435 = vtanh.pop %v434
    %436 = vst [vmem:[%s327] sm:$0xff] %v435
    %s437 = scalar_lea.vmem [#allocation3], 16
    %v438 = vld [vmem:[%s437] sm:$0xff]
    %v439 = vpack.c.bf16 %v435, %v435
    %v440 = vld [vmem:[#allocation4] sm:$0xf]
    %v441 = vld [vmem:[#allocation4 + $0x4] sm:$0xf]
    %v442 = vld [vmem:[#allocation4 + $0x8] sm:$0xf]
    %v443 = vld [vmem:[#allocation4 + $0xc] sm:$0xf]
    %v444 = vld [vmem:[#allocation4 + $0x10] sm:$0xf]
    %v445 = vld [vmem:[#allocation4 + $0x14] sm:$0xf]
    %v446 = vld [vmem:[#allocation4 + $0x18] sm:$0xf]
    %v447 = vld [vmem:[#allocation4 + $0x1c] sm:$0xf]
    %v448 = vld [vmem:[#allocation4 + $0x20] sm:$0xf]
    %v449 = vld [vmem:[#allocation4 + $0x24] sm:$0xf]
    %v450 = vld [vmem:[#allocation4 + $0x28] sm:$0xf]
    %v451 = vld [vmem:[#allocation4 + $0x2c] sm:$0xf]
    %v452 = vld [vmem:[#allocation4 + $0x30] sm:$0xf]
    %v453 = vld [vmem:[#allocation4 + $0x34] sm:$0xf]
    %v454 = vld [vmem:[#allocation4 + $0x38] sm:$0xf]
    %v455 = vld [vmem:[#allocation4 + $0x3c] sm:$0xf]
    %v472 = vunpack.c.l.b16 %v440
    %v473 = vunpack.c.l.b16 %v441
    %v474 = vunpack.c.l.b16 %v442
    %v475 = vunpack.c.l.b16 %v443
    %v476 = vunpack.c.l.b16 %v444
    %v477 = vunpack.c.l.b16 %v445
    %v478 = vunpack.c.l.b16 %v446
    %v479 = vunpack.c.l.b16 %v447
    %v480 = vunpack.c.l.b16 %v448
    %v481 = vunpack.c.l.b16 %v449
    %v482 = vunpack.c.l.b16 %v450
    %v483 = vunpack.c.l.b16 %v451
    %v484 = vunpack.c.l.b16 %v452
    %v485 = vunpack.c.l.b16 %v453
    %v486 = vunpack.c.l.b16 %v454
    %v487 = vunpack.c.l.b16 %v455
    %v488 = vpack.c.b16 %v473, %v472
    %v489 = vpack.c.b16 %v475, %v474
    %v490 = vpack.c.b16 %v477, %v476
    %v491 = vpack.c.b16 %v479, %v478
    %v492 = vpack.c.b16 %v481, %v480
    %v493 = vpack.c.b16 %v483, %v482
    %v494 = vpack.c.b16 %v485, %v484
    %v495 = vpack.c.b16 %v487, %v486
    %504 = vmatprep.subr.bf16.mxu0 0
    %505 = vmatpush1.bf16.msra.mxu0 %v488
    %506 = vmatprep.subr.bf16.mxu0 0
    %507 = vmatpush1.bf16.msra.mxu0 %v489
    %508 = vmatprep.subr.bf16.mxu0 0
    %509 = vmatpush1.bf16.msra.mxu0 %v490
    %510 = vmatprep.subr.bf16.mxu0 0
    %511 = vmatpush1.bf16.msra.mxu0 %v491
    %512 = vmatprep.subr.bf16.mxu0 0
    %513 = vmatpush1.bf16.msra.mxu0 %v492
    %514 = vmatprep.subr.bf16.mxu0 0
    %515 = vmatpush1.bf16.msra.mxu0 %v493
    %516 = vmatprep.subr.bf16.mxu0 0
    %517 = vmatpush1.bf16.msra.mxu0 %v494
    %518 = vmatprep.subr.bf16.mxu0 0
    %519 = vmatpush1.bf16.msra.mxu0 %v495
    %520 = vmatprep.subr.bf16.mxu0 0
    %521 = vmatpush1.bf16.msra.mxu0 0
    %522 = vmatprep.subr.bf16.mxu0 0
    %523 = vmatpush1.bf16.msra.mxu0 0
    %524 = vmatprep.subr.bf16.mxu0 0
    %525 = vmatpush1.bf16.msra.mxu0 0
    %526 = vmatprep.subr.bf16.mxu0 0
    %527 = vmatpush1.bf16.msra.mxu0 0
    %528 = vmatprep.subr.bf16.mxu0 0
    %529 = vmatpush1.bf16.msra.mxu0 0
    %530 = vmatprep.subr.bf16.mxu0 0
    %531 = vmatpush1.bf16.msra.mxu0 0
    %532 = vmatprep.subr.bf16.mxu0 0
    %533 = vmatpush1.bf16.msra.mxu0 0
    %534 = vmatprep.subr.bf16.mxu0 0
    %535 = vmatpush1.bf16.msra.mxu0 0
    %536 = vmatprep.mubr.bf16.mxu0 0
    %537 = vmatmul.mubr.bf16.gmra.mrb[0].mxu0 %v439
    %v538 = vpop.f32.mrb[0].mxu0
    %v539 = vadd.f32 0.0, %v538
    %v540 = vpop.f32.mrb[0].mxu0
    %v541 = vpop.f32.mrb[0].mxu0
    %v542 = vpop.f32.mrb[0].mxu0
    %543 = vdwg.mxu0
    %v544 = vadd.f32 %v438, %v539
    %v545 = vtanh.pop %v544
    %546 = vst [vmem:[%s437] sm:$0xff] %v545
    %s547 = scalar_lea.vmem [#allocation3], 24
    %v548 = vld [vmem:[%s547] sm:$0xff]
    %v549 = vpack.c.bf16 %v545, %v545
    %v550 = vld [vmem:[#allocation4] sm:$0xf]
    %v551 = vld [vmem:[#allocation4 + $0x4] sm:$0xf]
    %v552 = vld [vmem:[#allocation4 + $0x8] sm:$0xf]
    %v553 = vld [vmem:[#allocation4 + $0xc] sm:$0xf]
    %v554 = vld [vmem:[#allocation4 + $0x10] sm:$0xf]
    %v555 = vld [vmem:[#allocation4 + $0x14] sm:$0xf]
    %v556 = vld [vmem:[#allocation4 + $0x18] sm:$0xf]
    %v557 = vld [vmem:[#allocation4 + $0x1c] sm:$0xf]
    %v558 = vld [vmem:[#allocation4 + $0x20] sm:$0xf]
    %v559 = vld [vmem:[#allocation4 + $0x24] sm:$0xf]
    %v560 = vld [vmem:[#allocation4 + $0x28] sm:$0xf]
    %v561 = vld [vmem:[#allocation4 + $0x2c] sm:$0xf]
    %v562 = vld [vmem:[#allocation4 + $0x30] sm:$0xf]
    %v563 = vld [vmem:[#allocation4 + $0x34] sm:$0xf]
    %v564 = vld [vmem:[#allocation4 + $0x38] sm:$0xf]
    %v565 = vld [vmem:[#allocation4 + $0x3c] sm:$0xf]
    %v582 = vunpack.c.l.b16 %v550
    %v583 = vunpack.c.l.b16 %v551
    %v584 = vunpack.c.l.b16 %v552
    %v585 = vunpack.c.l.b16 %v553
    %v586 = vunpack.c.l.b16 %v554
    %v587 = vunpack.c.l.b16 %v555
    %v588 = vunpack.c.l.b16 %v556
    %v589 = vunpack.c.l.b16 %v557
    %v590 = vunpack.c.l.b16 %v558
    %v591 = vunpack.c.l.b16 %v559
    %v592 = vunpack.c.l.b16 %v560
    %v593 = vunpack.c.l.b16 %v561
    %v594 = vunpack.c.l.b16 %v562
    %v595 = vunpack.c.l.b16 %v563
    %v596 = vunpack.c.l.b16 %v564
    %v597 = vunpack.c.l.b16 %v565
    %v598 = vpack.c.b16 %v583, %v582
    %v599 = vpack.c.b16 %v585, %v584
    %v600 = vpack.c.b16 %v587, %v586
    %v601 = vpack.c.b16 %v589, %v588
    %v602 = vpack.c.b16 %v591, %v590
    %v603 = vpack.c.b16 %v593, %v592
    %v604 = vpack.c.b16 %v595, %v594
    %v605 = vpack.c.b16 %v597, %v596
    %614 = vmatprep.subr.bf16.mxu0 0
    %615 = vmatpush1.bf16.msra.mxu0 %v598
    %616 = vmatprep.subr.bf16.mxu0 0
    %617 = vmatpush1.bf16.msra.mxu0 %v599
    %618 = vmatprep.subr.bf16.mxu0 0
    %619 = vmatpush1.bf16.msra.mxu0 %v600
    %620 = vmatprep.subr.bf16.mxu0 0
    %621 = vmatpush1.bf16.msra.mxu0 %v601
    %622 = vmatprep.subr.bf16.mxu0 0
    %623 = vmatpush1.bf16.msra.mxu0 %v602
    %624 = vmatprep.subr.bf16.mxu0 0
    %625 = vmatpush1.bf16.msra.mxu0 %v603
    %626 = vmatprep.subr.bf16.mxu0 0
    %627 = vmatpush1.bf16.msra.mxu0 %v604
    %628 = vmatprep.subr.bf16.mxu0 0
    %629 = vmatpush1.bf16.msra.mxu0 %v605
    %630 = vmatprep.subr.bf16.mxu0 0
    %631 = vmatpush1.bf16.msra.mxu0 0
    %632 = vmatprep.subr.bf16.mxu0 0
    %633 = vmatpush1.bf16.msra.mxu0 0
    %634 = vmatprep.subr.bf16.mxu0 0
    %635 = vmatpush1.bf16.msra.mxu0 0
    %636 = vmatprep.subr.bf16.mxu0 0
    %637 = vmatpush1.bf16.msra.mxu0 0
    %638 = vmatprep.subr.bf16.mxu0 0
    %639 = vmatpush1.bf16.msra.mxu0 0
    %640 = vmatprep.subr.bf16.mxu0 0
    %641 = vmatpush1.bf16.msra.mxu0 0
    %642 = vmatprep.subr.bf16.mxu0 0
    %643 = vmatpush1.bf16.msra.mxu0 0
    %644 = vmatprep.subr.bf16.mxu0 0
    %645 = vmatpush1.bf16.msra.mxu0 0
    %646 = vmatprep.mubr.bf16.mxu0 0
    %647 = vmatmul.mubr.bf16.gmra.mrb[0].mxu0 %v549
    %v648 = vpop.f32.mrb[0].mxu0
    %v649 = vadd.f32 0.0, %v648
    %v650 = vpop.f32.mrb[0].mxu0
    %v651 = vpop.f32.mrb[0].mxu0
    %v652 = vpop.f32.mrb[0].mxu0
    %653 = vdwg.mxu0
    %v654 = vadd.f32 %v548, %v649
    %v655 = vtanh.pop %v654
    %656 = vst [vmem:[%s547] sm:$0xff] %v655
    %s657 = scalar_lea.vmem [#allocation3], 32
    %v658 = vld [vmem:[%s657] sm:$0xff]
    %v659 = vpack.c.bf16 %v655, %v655
    %v660 = vld [vmem:[#allocation4] sm:$0xf]
    %v661 = vld [vmem:[#allocation4 + $0x4] sm:$0xf]
    %v662 = vld [vmem:[#allocation4 + $0x8] sm:$0xf]
    %v663 = vld [vmem:[#allocation4 + $0xc] sm:$0xf]
    %v664 = vld [vmem:[#allocation4 + $0x10] sm:$0xf]
    %v665 = vld [vmem:[#allocation4 + $0x14] sm:$0xf]
    %v666 = vld [vmem:[#allocation4 + $0x18] sm:$0xf]
    %v667 = vld [vmem:[#allocation4 + $0x1c] sm:$0xf]
    %v668 = vld [vmem:[#allocation4 + $0x20] sm:$0xf]
    %v669 = vld [vmem:[#allocation4 + $0x24] sm:$0xf]
    %v670 = vld [vmem:[#allocation4 + $0x28] sm:$0xf]
    %v671 = vld [vmem:[#allocation4 + $0x2c] sm:$0xf]
    %v672 = vld [vmem:[#allocation4 + $0x30] sm:$0xf]
    %v673 = vld [vmem:[#allocation4 + $0x34] sm:$0xf]
    %v674 = vld [vmem:[#allocation4 + $0x38] sm:$0xf]
    %v675 = vld [vmem:[#allocation4 + $0x3c] sm:$0xf]
    %v692 = vunpack.c.l.b16 %v660
    %v693 = vunpack.c.l.b16 %v661
    %v694 = vunpack.c.l.b16 %v662
    %v695 = vunpack.c.l.b16 %v663
    %v696 = vunpack.c.l.b16 %v664
    %v697 = vunpack.c.l.b16 %v665
    %v698 = vunpack.c.l.b16 %v666
    %v699 = vunpack.c.l.b16 %v667
    %v700 = vunpack.c.l.b16 %v668
    %v701 = vunpack.c.l.b16 %v669
    %v702 = vunpack.c.l.b16 %v670
    %v703 = vunpack.c.l.b16 %v671
    %v704 = vunpack.c.l.b16 %v672
    %v705 = vunpack.c.l.b16 %v673
    %v706 = vunpack.c.l.b16 %v674
    %v707 = vunpack.c.l.b16 %v675
    %v708 = vpack.c.b16 %v693, %v692
    %v709 = vpack.c.b16 %v695, %v694
    %v710 = vpack.c.b16 %v697, %v696
    %v711 = vpack.c.b16 %v699, %v698
    %v712 = vpack.c.b16 %v701, %v700
    %v713 = vpack.c.b16 %v703, %v702
    %v714 = vpack.c.b16 %v705, %v704
    %v715 = vpack.c.b16 %v707, %v706
    %724 = vmatprep.subr.bf16.mxu0 0
    %725 = vmatpush1.bf16.msra.mxu0 %v708
    %726 = vmatprep.subr.bf16.mxu0 0
    %727 = vmatpush1.bf16.msra.mxu0 %v709
    %728 = vmatprep.subr.bf16.mxu0 0
    %729 = vmatpush1.bf16.msra.mxu0 %v710
    %730 = vmatprep.subr.bf16.mxu0 0
    %731 = vmatpush1.bf16.msra.mxu0 %v711
    %732 = vmatprep.subr.bf16.mxu0 0
    %733 = vmatpush1.bf16.msra.mxu0 %v712
    %734 = vmatprep.subr.bf16.mxu0 0
    %735 = vmatpush1.bf16.msra.mxu0 %v713
    %736 = vmatprep.subr.bf16.mxu0 0
    %737 = vmatpush1.bf16.msra.mxu0 %v714
    %738 = vmatprep.subr.bf16.mxu0 0
    %739 = vmatpush1.bf16.msra.mxu0 %v715
    %740 = vmatprep.subr.bf16.mxu0 0
    %741 = vmatpush1.bf16.msra.mxu0 0
    %742 = vmatprep.subr.bf16.mxu0 0
    %743 = vmatpush1.bf16.msra.mxu0 0
    %744 = vmatprep.subr.bf16.mxu0 0
    %745 = vmatpush1.bf16.msra.mxu0 0
    %746 = vmatprep.subr.bf16.mxu0 0
    %747 = vmatpush1.bf16.msra.mxu0 0
    %748 = vmatprep.subr.bf16.mxu0 0
    %749 = vmatpush1.bf16.msra.mxu0 0
    %750 = vmatprep.subr.bf16.mxu0 0
    %751 = vmatpush1.bf16.msra.mxu0 0
    %752 = vmatprep.subr.bf16.mxu0 0
    %753 = vmatpush1.bf16.msra.mxu0 0
    %754 = vmatprep.subr.bf16.mxu0 0
    %755 = vmatpush1.bf16.msra.mxu0 0
    %756 = vmatprep.mubr.bf16.mxu0 0
    %757 = vmatmul.mubr.bf16.gmra.mrb[0].mxu0 %v659
    %v758 = vpop.f32.mrb[0].mxu0
    %v759 = vadd.f32 0.0, %v758
    %v760 = vpop.f32.mrb[0].mxu0
    %v761 = vpop.f32.mrb[0].mxu0
    %v762 = vpop.f32.mrb[0].mxu0
    %763 = vdwg.mxu0
    %v764 = vadd.f32 %v658, %v759
    %v765 = vtanh.pop %v764
    %766 = vst [vmem:[%s657] sm:$0xff] %v765
    %s767 = scalar_lea.vmem [#allocation3], 40
    %v768 = vld [vmem:[%s767] sm:$0xff]
    %v769 = vpack.c.bf16 %v765, %v765
    %v770 = vld [vmem:[#allocation4] sm:$0xf]
    %v771 = vld [vmem:[#allocation4 + $0x4] sm:$0xf]
    %v772 = vld [vmem:[#allocation4 + $0x8] sm:$0xf]
    %v773 = vld [vmem:[#allocation4 + $0xc] sm:$0xf]
    %v774 = vld [vmem:[#allocation4 + $0x10] sm:$0xf]
    %v775 = vld [vmem:[#allocation4 + $0x14] sm:$0xf]
    %v776 = vld [vmem:[#allocation4 + $0x18] sm:$0xf]
    %v777 = vld [vmem:[#allocation4 + $0x1c] sm:$0xf]
    %v778 = vld [vmem:[#allocation4 + $0x20] sm:$0xf]
    %v779 = vld [vmem:[#allocation4 + $0x24] sm:$0xf]
    %v780 = vld [vmem:[#allocation4 + $0x28] sm:$0xf]
    %v781 = vld [vmem:[#allocation4 + $0x2c] sm:$0xf]
    %v782 = vld [vmem:[#allocation4 + $0x30] sm:$0xf]
    %v783 = vld [vmem:[#allocation4 + $0x34] sm:$0xf]
    %v784 = vld [vmem:[#allocation4 + $0x38] sm:$0xf]
    %v785 = vld [vmem:[#allocation4 + $0x3c] sm:$0xf]
    %v802 = vunpack.c.l.b16 %v770
    %v803 = vunpack.c.l.b16 %v771
    %v804 = vunpack.c.l.b16 %v772
    %v805 = vunpack.c.l.b16 %v773
    %v806 = vunpack.c.l.b16 %v774
    %v807 = vunpack.c.l.b16 %v775
    %v808 = vunpack.c.l.b16 %v776
    %v809 = vunpack.c.l.b16 %v777
    %v810 = vunpack.c.l.b16 %v778
    %v811 = vunpack.c.l.b16 %v779
    %v812 = vunpack.c.l.b16 %v780
    %v813 = vunpack.c.l.b16 %v781
    %v814 = vunpack.c.l.b16 %v782
    %v815 = vunpack.c.l.b16 %v783
    %v816 = vunpack.c.l.b16 %v784
    %v817 = vunpack.c.l.b16 %v785
    %v818 = vpack.c.b16 %v803, %v802
    %v819 = vpack.c.b16 %v805, %v804
    %v820 = vpack.c.b16 %v807, %v806
    %v821 = vpack.c.b16 %v809, %v808
    %v822 = vpack.c.b16 %v811, %v810
    %v823 = vpack.c.b16 %v813, %v812
    %v824 = vpack.c.b16 %v815, %v814
    %v825 = vpack.c.b16 %v817, %v816
    %834 = vmatprep.subr.bf16.mxu0 0
    %835 = vmatpush1.bf16.msra.mxu0 %v818
    %836 = vmatprep.subr.bf16.mxu0 0
    %837 = vmatpush1.bf16.msra.mxu0 %v819
    %838 = vmatprep.subr.bf16.mxu0 0
    %839 = vmatpush1.bf16.msra.mxu0 %v820
    %840 = vmatprep.subr.bf16.mxu0 0
    %841 = vmatpush1.bf16.msra.mxu0 %v821
    %842 = vmatprep.subr.bf16.mxu0 0
    %843 = vmatpush1.bf16.msra.mxu0 %v822
    %844 = vmatprep.subr.bf16.mxu0 0
    %845 = vmatpush1.bf16.msra.mxu0 %v823
    %846 = vmatprep.subr.bf16.mxu0 0
    %847 = vmatpush1.bf16.msra.mxu0 %v824
    %848 = vmatprep.subr.bf16.mxu0 0
    %849 = vmatpush1.bf16.msra.mxu0 %v825
    %850 = vmatprep.subr.bf16.mxu0 0
    %851 = vmatpush1.bf16.msra.mxu0 0
    %852 = vmatprep.subr.bf16.mxu0 0
    %853 = vmatpush1.bf16.msra.mxu0 0
    %854 = vmatprep.subr.bf16.mxu0 0
    %855 = vmatpush1.bf16.msra.mxu0 0
    %856 = vmatprep.subr.bf16.mxu0 0
    %857 = vmatpush1.bf16.msra.mxu0 0
    %858 = vmatprep.subr.bf16.mxu0 0
    %859 = vmatpush1.bf16.msra.mxu0 0
    %860 = vmatprep.subr.bf16.mxu0 0
    %861 = vmatpush1.bf16.msra.mxu0 0
    %862 = vmatprep.subr.bf16.mxu0 0
    %863 = vmatpush1.bf16.msra.mxu0 0
    %864 = vmatprep.subr.bf16.mxu0 0
    %865 = vmatpush1.bf16.msra.mxu0 0
    %866 = vmatprep.mubr.bf16.mxu0 0
    %867 = vmatmul.mubr.bf16.gmra.mrb[0].mxu0 %v769
    %v868 = vpop.f32.mrb[0].mxu0
    %v869 = vadd.f32 0.0, %v868
    %v870 = vpop.f32.mrb[0].mxu0
    %v871 = vpop.f32.mrb[0].mxu0
    %v872 = vpop.f32.mrb[0].mxu0
    %873 = vdwg.mxu0
    %v874 = vadd.f32 %v768, %v869
    %v875 = vtanh.pop %v874
    %876 = vst [vmem:[%s767] sm:$0xff] %v875
    %s877 = scalar_lea.vmem [#allocation3], 48
    %v878 = vld [vmem:[%s877] sm:$0xff]
    %v879 = vpack.c.bf16 %v875, %v875
    %v880 = vld [vmem:[#allocation4] sm:$0xf]
    %v881 = vld [vmem:[#allocation4 + $0x4] sm:$0xf]
    %v882 = vld [vmem:[#allocation4 + $0x8] sm:$0xf]
    %v883 = vld [vmem:[#allocation4 + $0xc] sm:$0xf]
    %v884 = vld [vmem:[#allocation4 + $0x10] sm:$0xf]
    %v885 = vld [vmem:[#allocation4 + $0x14] sm:$0xf]
    %v886 = vld [vmem:[#allocation4 + $0x18] sm:$0xf]
    %v887 = vld [vmem:[#allocation4 + $0x1c] sm:$0xf]
    %v888 = vld [vmem:[#allocation4 + $0x20] sm:$0xf]
    %v889 = vld [vmem:[#allocation4 + $0x24] sm:$0xf]
    %v890 = vld [vmem:[#allocation4 + $0x28] sm:$0xf]
    %v891 = vld [vmem:[#allocation4 + $0x2c] sm:$0xf]
    %v892 = vld [vmem:[#allocation4 + $0x30] sm:$0xf]
    %v893 = vld [vmem:[#allocation4 + $0x34] sm:$0xf]
    %v894 = vld [vmem:[#allocation4 + $0x38] sm:$0xf]
    %v895 = vld [vmem:[#allocation4 + $0x3c] sm:$0xf]
    %v912 = vunpack.c.l.b16 %v880
    %v913 = vunpack.c.l.b16 %v881
    %v914 = vunpack.c.l.b16 %v882
    %v915 = vunpack.c.l.b16 %v883
    %v916 = vunpack.c.l.b16 %v884
    %v917 = vunpack.c.l.b16 %v885
    %v918 = vunpack.c.l.b16 %v886
    %v919 = vunpack.c.l.b16 %v887
    %v920 = vunpack.c.l.b16 %v888
    %v921 = vunpack.c.l.b16 %v889
    %v922 = vunpack.c.l.b16 %v890
    %v923 = vunpack.c.l.b16 %v891
    %v924 = vunpack.c.l.b16 %v892
    %v925 = vunpack.c.l.b16 %v893
    %v926 = vunpack.c.l.b16 %v894
    %v927 = vunpack.c.l.b16 %v895
    %v928 = vpack.c.b16 %v913, %v912
    %v929 = vpack.c.b16 %v915, %v914
    %v930 = vpack.c.b16 %v917, %v916
    %v931 = vpack.c.b16 %v919, %v918
    %v932 = vpack.c.b16 %v921, %v920
    %v933 = vpack.c.b16 %v923, %v922
    %v934 = vpack.c.b16 %v925, %v924
    %v935 = vpack.c.b16 %v927, %v926
    %944 = vmatprep.subr.bf16.mxu0 0
    %945 = vmatpush1.bf16.msra.mxu0 %v928
    %946 = vmatprep.subr.bf16.mxu0 0
    %947 = vmatpush1.bf16.msra.mxu0 %v929
    %948 = vmatprep.subr.bf16.mxu0 0
    %949 = vmatpush1.bf16.msra.mxu0 %v930
    %950 = vmatprep.subr.bf16.mxu0 0
    %951 = vmatpush1.bf16.msra.mxu0 %v931
    %952 = vmatprep.subr.bf16.mxu0 0
    %953 = vmatpush1.bf16.msra.mxu0 %v932
    %954 = vmatprep.subr.bf16.mxu0 0
    %955 = vmatpush1.bf16.msra.mxu0 %v933
    %956 = vmatprep.subr.bf16.mxu0 0
    %957 = vmatpush1.bf16.msra.mxu0 %v934
    %958 = vmatprep.subr.bf16.mxu0 0
    %959 = vmatpush1.bf16.msra.mxu0 %v935
    %960 = vmatprep.subr.bf16.mxu0 0
    %961 = vmatpush1.bf16.msra.mxu0 0
    %962 = vmatprep.subr.bf16.mxu0 0
    %963 = vmatpush1.bf16.msra.mxu0 0
    %964 = vmatprep.subr.bf16.mxu0 0
    %965 = vmatpush1.bf16.msra.mxu0 0
    %966 = vmatprep.subr.bf16.mxu0 0
    %967 = vmatpush1.bf16.msra.mxu0 0
    %968 = vmatprep.subr.bf16.mxu0 0
    %969 = vmatpush1.bf16.msra.mxu0 0
    %970 = vmatprep.subr.bf16.mxu0 0
    %971 = vmatpush1.bf16.msra.mxu0 0
    %972 = vmatprep.subr.bf16.mxu0 0
    %973 = vmatpush1.bf16.msra.mxu0 0
    %974 = vmatprep.subr.bf16.mxu0 0
    %975 = vmatpush1.bf16.msra.mxu0 0
    %976 = vmatprep.mubr.bf16.mxu0 0
    %977 = vmatmul.mubr.bf16.gmra.mrb[0].mxu0 %v879
    %v978 = vpop.f32.mrb[0].mxu0
    %v979 = vadd.f32 0.0, %v978
    %v980 = vpop.f32.mrb[0].mxu0
    %v981 = vpop.f32.mrb[0].mxu0
    %v982 = vpop.f32.mrb[0].mxu0
    %983 = vdwg.mxu0
    %v984 = vadd.f32 %v878, %v979
    %v985 = vtanh.pop %v984
    %986 = vst [vmem:[%s877] sm:$0xff] %v985
    %s987 = scalar_lea.vmem [#allocation3], 56
    %v988 = vld [vmem:[%s987] sm:$0xff]
    %v989 = vpack.c.bf16 %v985, %v985
    %v990 = vld [vmem:[#allocation4] sm:$0xf]
    %v991 = vld [vmem:[#allocation4 + $0x4] sm:$0xf]
    %v992 = vld [vmem:[#allocation4 + $0x8] sm:$0xf]
    %v993 = vld [vmem:[#allocation4 + $0xc] sm:$0xf]
    %v994 = vld [vmem:[#allocation4 + $0x10] sm:$0xf]
    %v995 = vld [vmem:[#allocation4 + $0x14] sm:$0xf]
    %v996 = vld [vmem:[#allocation4 + $0x18] sm:$0xf]
    %v997 = vld [vmem:[#allocation4 + $0x1c] sm:$0xf]
    %v998 = vld [vmem:[#allocation4 + $0x20] sm:$0xf]
    %v999 = vld [vmem:[#allocation4 + $0x24] sm:$0xf]
    %v1000 = vld [vmem:[#allocation4 + $0x28] sm:$0xf]
    %v1001 = vld [vmem:[#allocation4 + $0x2c] sm:$0xf]
    %v1002 = vld [vmem:[#allocation4 + $0x30] sm:$0xf]
    %v1003 = vld [vmem:[#allocation4 + $0x34] sm:$0xf]
    %v1004 = vld [vmem:[#allocation4 + $0x38] sm:$0xf]
    %v1005 = vld [vmem:[#allocation4 + $0x3c] sm:$0xf]
    %v1022 = vunpack.c.l.b16 %v990
    %v1023 = vunpack.c.l.b16 %v991
    %v1024 = vunpack.c.l.b16 %v992
    %v1025 = vunpack.c.l.b16 %v993
    %v1026 = vunpack.c.l.b16 %v994
    %v1027 = vunpack.c.l.b16 %v995
    %v1028 = vunpack.c.l.b16 %v996
    %v1029 = vunpack.c.l.b16 %v997
    %v1030 = vunpack.c.l.b16 %v998
    %v1031 = vunpack.c.l.b16 %v999
    %v1032 = vunpack.c.l.b16 %v1000
    %v1033 = vunpack.c.l.b16 %v1001
    %v1034 = vunpack.c.l.b16 %v1002
    %v1035 = vunpack.c.l.b16 %v1003
    %v1036 = vunpack.c.l.b16 %v1004
    %v1037 = vunpack.c.l.b16 %v1005
    %v1038 = vpack.c.b16 %v1023, %v1022
    %v1039 = vpack.c.b16 %v1025, %v1024
    %v1040 = vpack.c.b16 %v1027, %v1026
    %v1041 = vpack.c.b16 %v1029, %v1028
    %v1042 = vpack.c.b16 %v1031, %v1030
    %v1043 = vpack.c.b16 %v1033, %v1032
    %v1044 = vpack.c.b16 %v1035, %v1034
    %v1045 = vpack.c.b16 %v1037, %v1036
    %1054 = vmatprep.subr.bf16.mxu0 0
    %1055 = vmatpush1.bf16.msra.mxu0 %v1038
    %1056 = vmatprep.subr.bf16.mxu0 0
    %1057 = vmatpush1.bf16.msra.mxu0 %v1039
    %1058 = vmatprep.subr.bf16.mxu0 0
    %1059 = vmatpush1.bf16.msra.mxu0 %v1040
    %1060 = vmatprep.subr.bf16.mxu0 0
    %1061 = vmatpush1.bf16.msra.mxu0 %v1041
    %1062 = vmatprep.subr.bf16.mxu0 0
    %1063 = vmatpush1.bf16.msra.mxu0 %v1042
    %1064 = vmatprep.subr.bf16.mxu0 0
    %1065 = vmatpush1.bf16.msra.mxu0 %v1043
    %1066 = vmatprep.subr.bf16.mxu0 0
    %1067 = vmatpush1.bf16.msra.mxu0 %v1044
    %1068 = vmatprep.subr.bf16.mxu0 0
    %1069 = vmatpush1.bf16.msra.mxu0 %v1045
    %1070 = vmatprep.subr.bf16.mxu0 0
    %1071 = vmatpush1.bf16.msra.mxu0 0
    %1072 = vmatprep.subr.bf16.mxu0 0
    %1073 = vmatpush1.bf16.msra.mxu0 0
    %1074 = vmatprep.subr.bf16.mxu0 0
    %1075 = vmatpush1.bf16.msra.mxu0 0
    %1076 = vmatprep.subr.bf16.mxu0 0
    %1077 = vmatpush1.bf16.msra.mxu0 0
    %1078 = vmatprep.subr.bf16.mxu0 0
    %1079 = vmatpush1.bf16.msra.mxu0 0
    %1080 = vmatprep.subr.bf16.mxu0 0
    %1081 = vmatpush1.bf16.msra.mxu0 0
    %1082 = vmatprep.subr.bf16.mxu0 0
    %1083 = vmatpush1.bf16.msra.mxu0 0
    %1084 = vmatprep.subr.bf16.mxu0 0
    %1085 = vmatpush1.bf16.msra.mxu0 0
    %1086 = vmatprep.mubr.bf16.mxu0 0
    %1087 = vmatmul.mubr.bf16.gmra.mrb[0].mxu0 %v989
    %v1088 = vpop.f32.mrb[0].mxu0
    %v1089 = vadd.f32 0.0, %v1088
    %v1090 = vpop.f32.mrb[0].mxu0
    %v1091 = vpop.f32.mrb[0].mxu0
    %v1092 = vpop.f32.mrb[0].mxu0
    %1093 = vdwg.mxu0
    %v1094 = vadd.f32 %v988, %v1089
    %v1095 = vtanh.pop %v1094
    %1096 = vst [vmem:[%s987] sm:$0xff] %v1095
    %1097 = vst [vmem:[#allocation2] sm:$0xff] %v1095
    %v1098 = vld [vmem:[#allocation3] sm:$0xff]
    %v1099 = vld [vmem:[#allocation3 + $0x8] sm:$0xff]
    %v1100 = vld [vmem:[#allocation3 + $0x10] sm:$0xff]
    %v1101 = vld [vmem:[#allocation3 + $0x18] sm:$0xff]
    %v1102 = vld [vmem:[#allocation3 + $0x20] sm:$0xff]
    %v1103 = vld [vmem:[#allocation3 + $0x28] sm:$0xff]
    %v1104 = vld [vmem:[#allocation3 + $0x30] sm:$0xff]
    %v1105 = vld [vmem:[#allocation3 + $0x38] sm:$0xff]
    %v1106 = vpack.c.bf16 %v1099, %v1098
    %v1107 = vpack.c.bf16 %v1101, %v1100
    %v1108 = vpack.c.bf16 %v1103, %v1102
    %v1109 = vpack.c.bf16 %v1105, %v1104
    %v1114 = vunpack.c.l.b16 %v1106
    %v1115 = vunpack.c.h.b16 %v1106
    %v1116 = vunpack.c.l.b16 %v1107
    %v1117 = vunpack.c.h.b16 %v1107
    %v1118 = vunpack.c.l.b16 %v1108
    %v1119 = vunpack.c.h.b16 %v1108
    %v1120 = vunpack.c.l.b16 %v1109
    %v1121 = vunpack.c.h.b16 %v1109
    %v1122 = vpack.c.b16 %v1114, %v1114
    %v1123 = vpack.c.b16 %v1115, %v1115
    %v1124 = vpack.c.b16 %v1116, %v1116
    %v1125 = vpack.c.b16 %v1117, %v1117
    %v1126 = vpack.c.b16 %v1118, %v1118
    %v1127 = vpack.c.b16 %v1119, %v1119
    %v1128 = vpack.c.b16 %v1120, %v1120
    %v1129 = vpack.c.b16 %v1121, %v1121
    %1138 = vst [vmem:[%s5] sm:$0xf] %v1122
    %1139 = vst [vmem:[%s5 + $0x4] sm:$0xf] %v1123
    %1140 = vst [vmem:[%s5 + $0x8] sm:$0xf] %v1124
    %1141 = vst [vmem:[%s5 + $0xc] sm:$0xf] %v1125
    %1142 = vst [vmem:[%s5 + $0x10] sm:$0xf] %v1126
    %1143 = vst [vmem:[%s5 + $0x14] sm:$0xf] %v1127
    %1144 = vst [vmem:[%s5 + $0x18] sm:$0xf] %v1128
    %1145 = vst [vmem:[%s5 + $0x1c] sm:$0xf] %v1129
    // Predicated region
    $region30: #{rnn_model_forward.2} parent=1 // pred_check
      _
    $region31: #{rnn_model_forward.2} parent=1 // pred_check_branch
      %1147 = sbr.rel (0) target = $region33
    $region32: #{rnn_model_forward.2} parent=1 // pred_region
      _
    $region33: #{rnn_model_forward.2} parent=1 // pred_fallthru
      _
    // Predicated region
    $region34: #{rnn_model_forward.2} parent=1 // pred_check
      _
    $region35: #{rnn_model_forward.2} parent=1 // pred_check_branch
      %1149 = sbr.rel (0) target = $region37
    $region36: #{rnn_model_forward.2} parent=1 // pred_region
      _
    $region37: #{rnn_model_forward.2} parent=1 // pred_fallthru
      _
    %1150 = vsyncpa [#allocation5], 1

</llo_original>
